<compile_context>
chip_gen: v6e
topology: v6e:2x2x1
jax: 0.10.0
libtpu: 0.0.40
codegen_flags: <defaults>
</compile_context>

<pallas_src>
import numpy as np
import jax
import jax.numpy as jnp
from jax import lax
from jax.experimental import pallas as pl
from jax.experimental.pallas import tpu as pltpu

C_IN = 4       # image channels
HIDDEN = 32    # denoiser hidden channels
KSIZE = 3      # 3x3 convolutions

# tap order t = 3*(di+1) + (dj+1) == 3*ki + kj, matching the HWIO weight flattening below
_TAPS = [(di, dj) for di in (-1, 0, 1) for dj in (-1, 0, 1)]


def _tap_masks(H, W):
    """(9, H*W) float32 validity masks, one per 3x3 tap (same order as _TAPS)."""
    rows = np.arange(H)[:, None]
    cols = np.arange(W)[None, :]
    ms = []
    for di, dj in _TAPS:
        valid = ((rows + di >= 0) & (rows + di < H) &
                 (cols + dj >= 0) & (cols + dj < W))
        ms.append(valid.astype(np.float32).reshape(-1))
    return jnp.asarray(np.stack(ms, axis=0))


def make_denoiser_params(key):
    k1, k2, k3, k4 = jax.random.split(key, 4)
    w1 = jax.random.normal(k1, (KSIZE, KSIZE, C_IN + 1, HIDDEN), jnp.float32) * 0.05
    b1 = jax.random.normal(k2, (1, HIDDEN), jnp.float32) * 0.01
    w2 = jax.random.normal(k3, (KSIZE, KSIZE, HIDDEN, C_IN), jnp.float32) * 0.05
    b2 = jax.random.normal(k4, (1, C_IN), jnp.float32) * 0.01
    return w1, b1, w2, b2


def prox_mapping(x_nchw, sigma, params):
    """Equivalent of PnPSolver.prox_mapping: denoiser(x, sigma). x is NCHW."""
    w1, b1, w2, b2 = params
    B, C, H, W = x_nchw.shape
    HW = H * W
    F = w1.shape[-1]
    CIN1 = C + 1

    # Flat lane-dense layout: (B, C, H*W).  No transposes needed anywhere.
    xf = x_nchw.reshape(B, C, HW).astype(jnp.float32)
    sig_vec = jnp.broadcast_to(jnp.asarray(sigma, jnp.float32).reshape(-1), (B,))

    # im2col-folded weights: one MXU matmul per conv (bf16 operands, f32 accumulation).
    w1m = jnp.transpose(w1, (3, 0, 1, 2)).reshape(F, 9 * CIN1).astype(jnp.bfloat16)
    w2m = jnp.transpose(w2, (3, 0, 1, 2)).reshape(C, 9 * F).astype(jnp.bfloat16)
    b1c = jnp.reshape(b1, (F, 1)).astype(jnp.float32)
    b2c = jnp.reshape(b2, (C, 1)).astype(jnp.float32)
    masks = _tap_masks(H, W)                                    # (9, HW) f32 {0,1}

    def kernel(sigma_ref, x_ref, masks_ref, w1_ref, b1_ref, w2_ref, b2_ref,
               out_ref, p1_ref, p2_ref):
        sig = sigma_ref[pl.program_id(0)]                       # SMEM scalar
        x = x_ref[0]                                            # (C, HW) f32

        def shift_cols(a, s):
            # result[:, p] = a[:, p + s], zero-filled outside [0, HW) (handles row halo)
            if s == 0:
                return a
            k = a.shape[0]
            z = jnp.zeros((k, abs(s)), jnp.float32)
            if s > 0:
                return jnp.concatenate([a[:, s:], z], axis=1)
            return jnp.concatenate([z, a[:, :s]], axis=1)

        # ---- im2col slab for conv1: row r = 5*t + c (c == C is the sigma channel) ----
        for t, (di, dj) in enumerate(_TAPS):
            s = di * W + dj
            m = masks_ref[t:t + 1, :]                           # (1, HW)
            xs = x if s == 0 else shift_cols(x, s) * m
            r = t * CIN1
            p1_ref[r:r + C, :] = xs
            p1_ref[r + C:r + CIN1, :] = sig * m                 # zero-padded sigma map

        # ---- conv1: single MXU dot (K = 9*(C+1)) + bias + ReLU ----
        h = jnp.dot(w1_ref[...], p1_ref[...].astype(jnp.bfloat16),
                    preferred_element_type=jnp.float32)         # (F, HW) f32
        h = jnp.maximum(h + b1_ref[...], 0.0)

        # ---- im2col slab for conv2 (bf16 scratch, 32-row aligned groups) ----
        for t, (di, dj) in enumerate(_TAPS):
            s = di * W + dj
            hs = h if s == 0 else shift_cols(h, s) * masks_ref[t:t + 1, :]
            p2_ref[t * F:(t + 1) * F, :] = hs.astype(jnp.bfloat16)

        # ---- conv2 (K = 9*F) + bias, residual subtract; lane-dense (C, HW) store ----
        res = jnp.dot(w2_ref[...], p2_ref[...],
                      preferred_element_type=jnp.float32) + b2_ref[...]
        out_ref[0] = x - res

    out_flat = pl.pallas_call(
        kernel,
        out_shape=jax.ShapeDtypeStruct((B, C, HW), jnp.float32),
        grid_spec=pltpu.PrefetchScalarGridSpec(
            num_scalar_prefetch=1,                              # sigma -> SMEM
            grid=(B,),
            in_specs=[
                pl.BlockSpec((1, C, HW), lambda b, s: (b, 0, 0)),      # x (flat, lane-dense)
                pl.BlockSpec((9, HW), lambda b, s: (0, 0)),            # per-tap halo masks
                pl.BlockSpec((F, 9 * CIN1), lambda b, s: (0, 0)),      # w1 (im2col, bf16)
                pl.BlockSpec((F, 1), lambda b, s: (0, 0)),             # b1
                pl.BlockSpec((C, 9 * F), lambda b, s: (0, 0)),         # w2 (im2col, bf16)
                pl.BlockSpec((C, 1), lambda b, s: (0, 0)),             # b2
            ],
            out_specs=pl.BlockSpec((1, C, HW), lambda b, s: (b, 0, 0)),
            scratch_shapes=[
                pltpu.VMEM((9 * CIN1, HW), jnp.float32),        # conv1 im2col slab
                pltpu.VMEM((9 * F, HW), jnp.bfloat16),          # conv2 im2col slab
            ],
        ),
        compiler_params=pltpu.CompilerParams(
            dimension_semantics=("parallel",)),
    )(sig_vec, xf, masks, w1m, b1c, w2m, b2c)

    return out_flat.reshape(B, C, H, W)


def prox_mapping_ref(x_nchw, sigma, params):
    """Pure-JAX f32 reference (mirrors the PyTorch denoiser semantics)."""
    w1, b1, w2, b2 = params
    B, C, H, W = x_nchw.shape
    x = jnp.transpose(x_nchw, (0, 2, 3, 1))
    sig = jnp.broadcast_to(jnp.reshape(sigma, (B, 1, 1, 1)).astype(x.dtype),
                           (B, H, W, 1))
    xin = jnp.concatenate([x, sig], axis=-1)
    dn = ('NHWC', 'HWIO', 'NHWC')
    h = lax.conv_general_dilated(xin, w1, (1, 1), 'SAME', dimension_numbers=dn)
    h = jnp.maximum(h + b1[0], 0.0)
    r = lax.conv_general_dilated(h, w2, (1, 1), 'SAME', dimension_numbers=dn)
    r = r + b2[0]
    out = x - r
    return jnp.transpose(out, (0, 3, 1, 2))


class PnPSolver:
    """JAX mirror of the abstract PyTorch PnPSolver base class."""

    def __init__(self, denoiser):
        self.denoiser = denoiser

    def reset(self, data):
        raise NotImplementedError  # abstract in the PyTorch module

    def forward(self, inputs, parameters, iter_num):
        raise NotImplementedError  # abstract in the PyTorch module

    def get_output(self, state):
        raise NotImplementedError  # abstract in the PyTorch module

    def prox_mapping(self, x, sigma):
        return self.denoiser(x, sigma)

    @property
    def num_var(self):
        raise NotImplementedError  # abstract in the PyTorch module

    def filter_aux_inputs(self, state):
        raise NotImplementedError  # abstract in the PyTorch module

    def filter_hyperparameter(self, action):
        raise NotImplementedError  # abstract in the PyTorch module


if __name__ == "__main__":
    key = jax.random.PRNGKey(0)
    kx, ks, kp = jax.random.split(key, 3)

    B, C, H, W = 2, C_IN, 16, 16
    x = jax.random.normal(kx, (B, C, H, W), jnp.float32)
    sigma = jax.random.uniform(ks, (B,), jnp.float32, 0.01, 0.2)
    params = make_denoiser_params(kp)

    solver = PnPSolver(jax.jit(lambda xx, ss: prox_mapping(xx, ss, params)))
    out = solver.prox_mapping(x, sigma)
    out = jax.block_until_ready(out)

    ref = prox_mapping_ref(x, sigma, params)
    assert out.shape == (B, C, H, W)
    assert out.dtype == jnp.float32
    err = float(jnp.max(jnp.abs(out - ref)))
    # bf16 MXU operands with f32 accumulation vs. f32 reference -> relaxed tolerance
    assert err < 3e-2, f"max abs err {err}"

    print("KERNEL_OK")
</pallas_src>

<mosaic_0001>
module attributes {stable_mosaic.version = 11 : i64} {
  func.func @kernel(%arg0: i32, %arg1: memref<2xf32, #tpu.memory_space<smem>>, %arg2: memref<1x4x256xf32, #tpu.memory_space<vmem>>, %arg3: memref<9x256xf32, #tpu.memory_space<vmem>>, %arg4: memref<32x45xbf16, #tpu.memory_space<vmem>>, %arg5: memref<32x1xf32, #tpu.memory_space<vmem>>, %arg6: memref<4x288xbf16, #tpu.memory_space<vmem>>, %arg7: memref<4x1xf32, #tpu.memory_space<vmem>>, %arg8: memref<1x4x256xf32, #tpu.memory_space<vmem>>, %arg9: memref<45x256xf32, #tpu.memory_space<vmem>>, %arg10: memref<288x256xbf16, #tpu.memory_space<vmem>>) attributes {dimension_semantics = [#tpu.dimension_semantics<parallel>], iteration_bounds = array<i64: 2>, scalar_prefetch = 1 : i64, scratch_operands = 2 : i64, tpu.core_type = #tpu.core_type<tc>, window_params = [{transform_indices = @transform_0, window_bounds = array<i64: 1, 4, 256>}, {pipeline_mode = #tpu.pipeline_mode<synchronous>, transform_indices = @transform_1, window_bounds = array<i64: 9, 256>}, {pipeline_mode = #tpu.pipeline_mode<synchronous>, transform_indices = @transform_2, window_bounds = array<i64: 32, 45>}, {pipeline_mode = #tpu.pipeline_mode<synchronous>, transform_indices = @transform_3, window_bounds = array<i64: 32, 1>}, {pipeline_mode = #tpu.pipeline_mode<synchronous>, transform_indices = @transform_4, window_bounds = array<i64: 4, 288>}, {pipeline_mode = #tpu.pipeline_mode<synchronous>, transform_indices = @transform_5, window_bounds = array<i64: 4, 1>}, {transform_indices = @transform_6, window_bounds = array<i64: 1, 4, 256>}]} {
    %0 = arith.index_cast %arg0 : i32 to index
    %1 = memref.load %arg1[%0] : memref<2xf32, #tpu.memory_space<smem>>
    %c0 = arith.constant 0 : index
    %c0_0 = arith.constant 0 : index
    %c0_1 = arith.constant 0 : index
    %2 = vector.load %arg2[%c0, %c0_0, %c0_1] : memref<1x4x256xf32, #tpu.memory_space<vmem>>, vector<1x4x256xf32>
    %3 = vector.shape_cast %2 : vector<1x4x256xf32> to vector<4x256xf32>
    %c0_2 = arith.constant 0 : index
    %c0_3 = arith.constant 0 : index
    %4 = vector.load %arg3[%c0_2, %c0_3] : memref<9x256xf32, #tpu.memory_space<vmem>>, vector<1x256xf32>
    %cst = arith.constant 0.000000e+00 : f32
    %5 = vector.broadcast %cst : f32 to vector<4x17xf32>
    %6 = vector.extract_strided_slice %3 {offsets = [0, 0], sizes = [4, 239], strides = [1, 1]} : vector<4x256xf32> to vector<4x239xf32>
    %7 = tpu.concatenate %5, %6 in 1 : vector<4x17xf32>, vector<4x239xf32> -> vector<4x256xf32>
    %8 = vector.broadcast %4 : vector<1x256xf32> to vector<4x256xf32>
    %9 = arith.mulf %7, %8 : vector<4x256xf32>
    %c0_4 = arith.constant 0 : index
    %c0_5 = arith.constant 0 : index
    %10 = vector.load %arg9[%c0_4, %c0_5] : memref<45x256xf32, #tpu.memory_space<vmem>>, vector<4x256xf32>
    tpu.vector_store %arg9[%c0_4, %c0_5], %9 {strides = array<i32>} : memref<45x256xf32, #tpu.memory_space<vmem>>, vector<4x256xf32>,
    %11 = vector.broadcast %1 : f32 to vector<1x256xf32>
    %12 = arith.mulf %11, %4 : vector<1x256xf32>
    %c4 = arith.constant 4 : index
    %c0_6 = arith.constant 0 : index
    %13 = vector.load %arg9[%c4, %c0_6] : memref<45x256xf32, #tpu.memory_space<vmem>>, vector<1x256xf32>
    tpu.vector_store %arg9[%c4, %c0_6], %12 {strides = array<i32>} : memref<45x256xf32, #tpu.memory_space<vmem>>, vector<1x256xf32>,
    %c1 = arith.constant 1 : index
    %c0_7 = arith.constant 0 : index
    %14 = vector.load %arg3[%c1, %c0_7] : memref<9x256xf32, #tpu.memory_space<vmem>>, vector<1x256xf32>
    %cst_8 = arith.constant 0.000000e+00 : f32
    %15 = vector.broadcast %cst_8 : f32 to vector<4x16xf32>
    %16 = vector.extract_strided_slice %3 {offsets = [0, 0], sizes = [4, 240], strides = [1, 1]} : vector<4x256xf32> to vector<4x240xf32>
    %17 = tpu.concatenate %15, %16 in 1 : vector<4x16xf32>, vector<4x240xf32> -> vector<4x256xf32>
    %18 = vector.broadcast %14 : vector<1x256xf32> to vector<4x256xf32>
    %19 = arith.mulf %17, %18 : vector<4x256xf32>
    %c5 = arith.constant 5 : index
    %c0_9 = arith.constant 0 : index
    %20 = vector.load %arg9[%c5, %c0_9] : memref<45x256xf32, #tpu.memory_space<vmem>>, vector<4x256xf32>
    tpu.vector_store %arg9[%c5, %c0_9], %19 {strides = array<i32>} : memref<45x256xf32, #tpu.memory_space<vmem>>, vector<4x256xf32>,
    %21 = vector.broadcast %1 : f32 to vector<1x256xf32>
    %22 = arith.mulf %21, %14 : vector<1x256xf32>
    %c9 = arith.constant 9 : index
    %c0_10 = arith.constant 0 : index
    %23 = vector.load %arg9[%c9, %c0_10] : memref<45x256xf32, #tpu.memory_space<vmem>>, vector<1x256xf32>
    tpu.vector_store %arg9[%c9, %c0_10], %22 {strides = array<i32>} : memref<45x256xf32, #tpu.memory_space<vmem>>, vector<1x256xf32>,
    %c2 = arith.constant 2 : index
    %c0_11 = arith.constant 0 : index
    %24 = vector.load %arg3[%c2, %c0_11] : memref<9x256xf32, #tpu.memory_space<vmem>>, vector<1x256xf32>
    %cst_12 = arith.constant 0.000000e+00 : f32
    %25 = vector.broadcast %cst_12 : f32 to vector<4x15xf32>
    %26 = vector.extract_strided_slice %3 {offsets = [0, 0], sizes = [4, 241], strides = [1, 1]} : vector<4x256xf32> to vector<4x241xf32>
    %27 = tpu.concatenate %25, %26 in 1 : vector<4x15xf32>, vector<4x241xf32> -> vector<4x256xf32>
    %28 = vector.broadcast %24 : vector<1x256xf32> to vector<4x256xf32>
    %29 = arith.mulf %27, %28 : vector<4x256xf32>
    %c10 = arith.constant 10 : index
    %c0_13 = arith.constant 0 : index
    %30 = vector.load %arg9[%c10, %c0_13] : memref<45x256xf32, #tpu.memory_space<vmem>>, vector<4x256xf32>
    tpu.vector_store %arg9[%c10, %c0_13], %29 {strides = array<i32>} : memref<45x256xf32, #tpu.memory_space<vmem>>, vector<4x256xf32>,
    %31 = vector.broadcast %1 : f32 to vector<1x256xf32>
    %32 = arith.mulf %31, %24 : vector<1x256xf32>
    %c14 = arith.constant 14 : index
    %c0_14 = arith.constant 0 : index
    %33 = vector.load %arg9[%c14, %c0_14] : memref<45x256xf32, #tpu.memory_space<vmem>>, vector<1x256xf32>
    tpu.vector_store %arg9[%c14, %c0_14], %32 {strides = array<i32>} : memref<45x256xf32, #tpu.memory_space<vmem>>, vector<1x256xf32>,
    %c3 = arith.constant 3 : index
    %c0_15 = arith.constant 0 : index
    %34 = vector.load %arg3[%c3, %c0_15] : memref<9x256xf32, #tpu.memory_space<vmem>>, vector<1x256xf32>
    %cst_16 = arith.constant 0.000000e+00 : f32
    %35 = vector.broadcast %cst_16 : f32 to vector<4x1xf32>
    %36 = vector.extract_strided_slice %3 {offsets = [0, 0], sizes = [4, 255], strides = [1, 1]} : vector<4x256xf32> to vector<4x255xf32>
    %37 = tpu.concatenate %35, %36 in 1 : vector<4x1xf32>, vector<4x255xf32> -> vector<4x256xf32>
    %38 = vector.broadcast %34 : vector<1x256xf32> to vector<4x256xf32>
    %39 = arith.mulf %37, %38 : vector<4x256xf32>
    %c15 = arith.constant 15 : index
    %c0_17 = arith.constant 0 : index
    %40 = vector.load %arg9[%c15, %c0_17] : memref<45x256xf32, #tpu.memory_space<vmem>>, vector<4x256xf32>
    tpu.vector_store %arg9[%c15, %c0_17], %39 {strides = array<i32>} : memref<45x256xf32, #tpu.memory_space<vmem>>, vector<4x256xf32>,
    %41 = vector.broadcast %1 : f32 to vector<1x256xf32>
    %42 = arith.mulf %41, %34 : vector<1x256xf32>
    %c19 = arith.constant 19 : index
    %c0_18 = arith.constant 0 : index
    %43 = vector.load %arg9[%c19, %c0_18] : memref<45x256xf32, #tpu.memory_space<vmem>>, vector<1x256xf32>
    tpu.vector_store %arg9[%c19, %c0_18], %42 {strides = array<i32>} : memref<45x256xf32, #tpu.memory_space<vmem>>, vector<1x256xf32>,
    %c4_19 = arith.constant 4 : index
    %c0_20 = arith.constant 0 : index
    %44 = vector.load %arg3[%c4_19, %c0_20] : memref<9x256xf32, #tpu.memory_space<vmem>>, vector<1x256xf32>
    %c20 = arith.constant 20 : index
    %c0_21 = arith.constant 0 : index
    %45 = vector.load %arg9[%c20, %c0_21] : memref<45x256xf32, #tpu.memory_space<vmem>>, vector<4x256xf32>
    tpu.vector_store %arg9[%c20, %c0_21], %3 {strides = array<i32>} : memref<45x256xf32, #tpu.memory_space<vmem>>, vector<4x256xf32>,
    %46 = vector.broadcast %1 : f32 to vector<1x256xf32>
    %47 = arith.mulf %46, %44 : vector<1x256xf32>
    %c24 = arith.constant 24 : index
    %c0_22 = arith.constant 0 : index
    %48 = vector.load %arg9[%c24, %c0_22] : memref<45x256xf32, #tpu.memory_space<vmem>>, vector<1x256xf32>
    tpu.vector_store %arg9[%c24, %c0_22], %47 {strides = array<i32>} : memref<45x256xf32, #tpu.memory_space<vmem>>, vector<1x256xf32>,
    %c5_23 = arith.constant 5 : index
    %c0_24 = arith.constant 0 : index
    %49 = vector.load %arg3[%c5_23, %c0_24] : memref<9x256xf32, #tpu.memory_space<vmem>>, vector<1x256xf32>
    %cst_25 = arith.constant 0.000000e+00 : f32
    %50 = vector.broadcast %cst_25 : f32 to vector<4x1xf32>
    %51 = vector.extract_strided_slice %3 {offsets = [0, 1], sizes = [4, 255], strides = [1, 1]} : vector<4x256xf32> to vector<4x255xf32>
    %52 = tpu.concatenate %51, %50 in 1 : vector<4x255xf32>, vector<4x1xf32> -> vector<4x256xf32>
    %53 = vector.broadcast %49 : vector<1x256xf32> to vector<4x256xf32>
    %54 = arith.mulf %52, %53 : vector<4x256xf32>
    %c25 = arith.constant 25 : index
    %c0_26 = arith.constant 0 : index
    %55 = vector.load %arg9[%c25, %c0_26] : memref<45x256xf32, #tpu.memory_space<vmem>>, vector<4x256xf32>
    tpu.vector_store %arg9[%c25, %c0_26], %54 {strides = array<i32>} : memref<45x256xf32, #tpu.memory_space<vmem>>, vector<4x256xf32>,
    %56 = vector.broadcast %1 : f32 to vector<1x256xf32>
    %57 = arith.mulf %56, %49 : vector<1x256xf32>
    %c29 = arith.constant 29 : index
    %c0_27 = arith.constant 0 : index
    %58 = vector.load %arg9[%c29, %c0_27] : memref<45x256xf32, #tpu.memory_space<vmem>>, vector<1x256xf32>
    tpu.vector_store %arg9[%c29, %c0_27], %57 {strides = array<i32>} : memref<45x256xf32, #tpu.memory_space<vmem>>, vector<1x256xf32>,
    %c6 = arith.constant 6 : index
    %c0_28 = arith.constant 0 : index
    %59 = vector.load %arg3[%c6, %c0_28] : memref<9x256xf32, #tpu.memory_space<vmem>>, vector<1x256xf32>
    %cst_29 = arith.constant 0.000000e+00 : f32
    %60 = vector.broadcast %cst_29 : f32 to vector<4x15xf32>
    %61 = vector.extract_strided_slice %3 {offsets = [0, 15], sizes = [4, 241], strides = [1, 1]} : vector<4x256xf32> to vector<4x241xf32>
    %62 = tpu.concatenate %61, %60 in 1 : vector<4x241xf32>, vector<4x15xf32> -> vector<4x256xf32>
    %63 = vector.broadcast %59 : vector<1x256xf32> to vector<4x256xf32>
    %64 = arith.mulf %62, %63 : vector<4x256xf32>
    %c30 = arith.constant 30 : index
    %c0_30 = arith.constant 0 : index
    %65 = vector.load %arg9[%c30, %c0_30] : memref<45x256xf32, #tpu.memory_space<vmem>>, vector<4x256xf32>
    tpu.vector_store %arg9[%c30, %c0_30], %64 {strides = array<i32>} : memref<45x256xf32, #tpu.memory_space<vmem>>, vector<4x256xf32>,
    %66 = vector.broadcast %1 : f32 to vector<1x256xf32>
    %67 = arith.mulf %66, %59 : vector<1x256xf32>
    %c34 = arith.constant 34 : index
    %c0_31 = arith.constant 0 : index
    %68 = vector.load %arg9[%c34, %c0_31] : memref<45x256xf32, #tpu.memory_space<vmem>>, vector<1x256xf32>
    tpu.vector_store %arg9[%c34, %c0_31], %67 {strides = array<i32>} : memref<45x256xf32, #tpu.memory_space<vmem>>, vector<1x256xf32>,
    %c7 = arith.constant 7 : index
    %c0_32 = arith.constant 0 : index
    %69 = vector.load %arg3[%c7, %c0_32] : memref<9x256xf32, #tpu.memory_space<vmem>>, vector<1x256xf32>
    %cst_33 = arith.constant 0.000000e+00 : f32
    %70 = vector.broadcast %cst_33 : f32 to vector<4x16xf32>
    %71 = vector.extract_strided_slice %3 {offsets = [0, 16], sizes = [4, 240], strides = [1, 1]} : vector<4x256xf32> to vector<4x240xf32>
    %72 = tpu.concatenate %71, %70 in 1 : vector<4x240xf32>, vector<4x16xf32> -> vector<4x256xf32>
    %73 = vector.broadcast %69 : vector<1x256xf32> to vector<4x256xf32>
    %74 = arith.mulf %72, %73 : vector<4x256xf32>
    %c35 = arith.constant 35 : index
    %c0_34 = arith.constant 0 : index
    %75 = vector.load %arg9[%c35, %c0_34] : memref<45x256xf32, #tpu.memory_space<vmem>>, vector<4x256xf32>
    tpu.vector_store %arg9[%c35, %c0_34], %74 {strides = array<i32>} : memref<45x256xf32, #tpu.memory_space<vmem>>, vector<4x256xf32>,
    %76 = vector.broadcast %1 : f32 to vector<1x256xf32>
    %77 = arith.mulf %76, %69 : vector<1x256xf32>
    %c39 = arith.constant 39 : index
    %c0_35 = arith.constant 0 : index
    %78 = vector.load %arg9[%c39, %c0_35] : memref<45x256xf32, #tpu.memory_space<vmem>>, vector<1x256xf32>
    tpu.vector_store %arg9[%c39, %c0_35], %77 {strides = array<i32>} : memref<45x256xf32, #tpu.memory_space<vmem>>, vector<1x256xf32>,
    %c8 = arith.constant 8 : index
    %c0_36 = arith.constant 0 : index
    %79 = vector.load %arg3[%c8, %c0_36] : memref<9x256xf32, #tpu.memory_space<vmem>>, vector<1x256xf32>
    %cst_37 = arith.constant 0.000000e+00 : f32
    %80 = vector.broadcast %cst_37 : f32 to vector<4x17xf32>
    %81 = vector.extract_strided_slice %3 {offsets = [0, 17], sizes = [4, 239], strides = [1, 1]} : vector<4x256xf32> to vector<4x239xf32>
    %82 = tpu.concatenate %81, %80 in 1 : vector<4x239xf32>, vector<4x17xf32> -> vector<4x256xf32>
    %83 = vector.broadcast %79 : vector<1x256xf32> to vector<4x256xf32>
    %84 = arith.mulf %82, %83 : vector<4x256xf32>
    %c40 = arith.constant 40 : index
    %c0_38 = arith.constant 0 : index
    %85 = vector.load %arg9[%c40, %c0_38] : memref<45x256xf32, #tpu.memory_space<vmem>>, vector<4x256xf32>
    tpu.vector_store %arg9[%c40, %c0_38], %84 {strides = array<i32>} : memref<45x256xf32, #tpu.memory_space<vmem>>, vector<4x256xf32>,
    %86 = vector.broadcast %1 : f32 to vector<1x256xf32>
    %87 = arith.mulf %86, %79 : vector<1x256xf32>
    %c44 = arith.constant 44 : index
    %c0_39 = arith.constant 0 : index
    %88 = vector.load %arg9[%c44, %c0_39] : memref<45x256xf32, #tpu.memory_space<vmem>>, vector<1x256xf32>
    tpu.vector_store %arg9[%c44, %c0_39], %87 {strides = array<i32>} : memref<45x256xf32, #tpu.memory_space<vmem>>, vector<1x256xf32>,
    %c0_40 = arith.constant 0 : index
    %c0_41 = arith.constant 0 : index
    %89 = vector.load %arg4[%c0_40, %c0_41] : memref<32x45xbf16, #tpu.memory_space<vmem>>, vector<32x45xbf16>
    %c0_42 = arith.constant 0 : index
    %c0_43 = arith.constant 0 : index
    %90 = vector.load %arg9[%c0_42, %c0_43] : memref<45x256xf32, #tpu.memory_space<vmem>>, vector<45x256xf32>
    %91 = arith.truncf %90 : vector<45x256xf32> to vector<45x256xbf16>
    %cst_44 = arith.constant dense<0.000000e+00> : vector<32x256xf32>
    %92 = tpu.matmul %89, %91, %cst_44 {dimension_numbers = #tpu.dot_dimension_numbers<[1], [0], [0], [1], [0, 0, 1, 1], [], []>} : vector<32x45xbf16>, vector<45x256xbf16>, vector<32x256xf32> -> vector<32x256xf32>
    %c0_45 = arith.constant 0 : index
    %c0_46 = arith.constant 0 : index
    %93 = vector.load %arg5[%c0_45, %c0_46] : memref<32x1xf32, #tpu.memory_space<vmem>>, vector<32x1xf32>
    %94 = vector.broadcast %93 : vector<32x1xf32> to vector<32x256xf32>
    %95 = arith.addf %92, %94 : vector<32x256xf32>
    %cst_47 = arith.constant 0.000000e+00 : f32
    %96 = vector.broadcast %cst_47 : f32 to vector<32x256xf32>
    %97 = arith.maximumf %95, %96 : vector<32x256xf32>
    %cst_48 = arith.constant 0.000000e+00 : f32
    %98 = vector.broadcast %cst_48 : f32 to vector<32x17xf32>
    %99 = vector.extract_strided_slice %97 {offsets = [0, 0], sizes = [32, 239], strides = [1, 1]} : vector<32x256xf32> to vector<32x239xf32>
    %100 = tpu.concatenate %98, %99 in 1 : vector<32x17xf32>, vector<32x239xf32> -> vector<32x256xf32>
    %c0_49 = arith.constant 0 : index
    %c0_50 = arith.constant 0 : index
    %101 = vector.load %arg3[%c0_49, %c0_50] : memref<9x256xf32, #tpu.memory_space<vmem>>, vector<1x256xf32>
    %102 = vector.broadcast %101 : vector<1x256xf32> to vector<32x256xf32>
    %103 = arith.mulf %100, %102 : vector<32x256xf32>
    %104 = arith.truncf %103 : vector<32x256xf32> to vector<32x256xbf16>
    %c0_51 = arith.constant 0 : index
    %c0_52 = arith.constant 0 : index
    %105 = vector.load %arg10[%c0_51, %c0_52] : memref<288x256xbf16, #tpu.memory_space<vmem>>, vector<32x256xbf16>
    tpu.vector_store %arg10[%c0_51, %c0_52], %104 {strides = array<i32>} : memref<288x256xbf16, #tpu.memory_space<vmem>>, vector<32x256xbf16>,
    %cst_53 = arith.constant 0.000000e+00 : f32
    %106 = vector.broadcast %cst_53 : f32 to vector<32x16xf32>
    %107 = vector.extract_strided_slice %97 {offsets = [0, 0], sizes = [32, 240], strides = [1, 1]} : vector<32x256xf32> to vector<32x240xf32>
    %108 = tpu.concatenate %106, %107 in 1 : vector<32x16xf32>, vector<32x240xf32> -> vector<32x256xf32>
    %c1_54 = arith.constant 1 : index
    %c0_55 = arith.constant 0 : index
    %109 = vector.load %arg3[%c1_54, %c0_55] : memref<9x256xf32, #tpu.memory_space<vmem>>, vector<1x256xf32>
    %110 = vector.broadcast %109 : vector<1x256xf32> to vector<32x256xf32>
    %111 = arith.mulf %108, %110 : vector<32x256xf32>
    %112 = arith.truncf %111 : vector<32x256xf32> to vector<32x256xbf16>
    %c32 = arith.constant 32 : index
    %c0_56 = arith.constant 0 : index
    %113 = vector.load %arg10[%c32, %c0_56] : memref<288x256xbf16, #tpu.memory_space<vmem>>, vector<32x256xbf16>
    tpu.vector_store %arg10[%c32, %c0_56], %112 {strides = array<i32>} : memref<288x256xbf16, #tpu.memory_space<vmem>>, vector<32x256xbf16>,
    %cst_57 = arith.constant 0.000000e+00 : f32
    %114 = vector.broadcast %cst_57 : f32 to vector<32x15xf32>
    %115 = vector.extract_strided_slice %97 {offsets = [0, 0], sizes = [32, 241], strides = [1, 1]} : vector<32x256xf32> to vector<32x241xf32>
    %116 = tpu.concatenate %114, %115 in 1 : vector<32x15xf32>, vector<32x241xf32> -> vector<32x256xf32>
    %c2_58 = arith.constant 2 : index
    %c0_59 = arith.constant 0 : index
    %117 = vector.load %arg3[%c2_58, %c0_59] : memref<9x256xf32, #tpu.memory_space<vmem>>, vector<1x256xf32>
    %118 = vector.broadcast %117 : vector<1x256xf32> to vector<32x256xf32>
    %119 = arith.mulf %116, %118 : vector<32x256xf32>
    %120 = arith.truncf %119 : vector<32x256xf32> to vector<32x256xbf16>
    %c64 = arith.constant 64 : index
    %c0_60 = arith.constant 0 : index
    %121 = vector.load %arg10[%c64, %c0_60] : memref<288x256xbf16, #tpu.memory_space<vmem>>, vector<32x256xbf16>
    tpu.vector_store %arg10[%c64, %c0_60], %120 {strides = array<i32>} : memref<288x256xbf16, #tpu.memory_space<vmem>>, vector<32x256xbf16>,
    %cst_61 = arith.constant 0.000000e+00 : f32
    %122 = vector.broadcast %cst_61 : f32 to vector<32x1xf32>
    %123 = vector.extract_strided_slice %97 {offsets = [0, 0], sizes = [32, 255], strides = [1, 1]} : vector<32x256xf32> to vector<32x255xf32>
    %124 = tpu.concatenate %122, %123 in 1 : vector<32x1xf32>, vector<32x255xf32> -> vector<32x256xf32>
    %c3_62 = arith.constant 3 : index
    %c0_63 = arith.constant 0 : index
    %125 = vector.load %arg3[%c3_62, %c0_63] : memref<9x256xf32, #tpu.memory_space<vmem>>, vector<1x256xf32>
    %126 = vector.broadcast %125 : vector<1x256xf32> to vector<32x256xf32>
    %127 = arith.mulf %124, %126 : vector<32x256xf32>
    %128 = arith.truncf %127 : vector<32x256xf32> to vector<32x256xbf16>
    %c96 = arith.constant 96 : index
    %c0_64 = arith.constant 0 : index
    %129 = vector.load %arg10[%c96, %c0_64] : memref<288x256xbf16, #tpu.memory_space<vmem>>, vector<32x256xbf16>
    tpu.vector_store %arg10[%c96, %c0_64], %128 {strides = array<i32>} : memref<288x256xbf16, #tpu.memory_space<vmem>>, vector<32x256xbf16>,
    %130 = arith.truncf %97 : vector<32x256xf32> to vector<32x256xbf16>
    %c128 = arith.constant 128 : index
    %c0_65 = arith.constant 0 : index
    %131 = vector.load %arg10[%c128, %c0_65] : memref<288x256xbf16, #tpu.memory_space<vmem>>, vector<32x256xbf16>
    tpu.vector_store %arg10[%c128, %c0_65], %130 {strides = array<i32>} : memref<288x256xbf16, #tpu.memory_space<vmem>>, vector<32x256xbf16>,
    %cst_66 = arith.constant 0.000000e+00 : f32
    %132 = vector.broadcast %cst_66 : f32 to vector<32x1xf32>
    %133 = vector.extract_strided_slice %97 {offsets = [0, 1], sizes = [32, 255], strides = [1, 1]} : vector<32x256xf32> to vector<32x255xf32>
    %134 = tpu.concatenate %133, %132 in 1 : vector<32x255xf32>, vector<32x1xf32> -> vector<32x256xf32>
    %c5_67 = arith.constant 5 : index
    %c0_68 = arith.constant 0 : index
    %135 = vector.load %arg3[%c5_67, %c0_68] : memref<9x256xf32, #tpu.memory_space<vmem>>, vector<1x256xf32>
    %136 = vector.broadcast %135 : vector<1x256xf32> to vector<32x256xf32>
    %137 = arith.mulf %134, %136 : vector<32x256xf32>
    %138 = arith.truncf %137 : vector<32x256xf32> to vector<32x256xbf16>
    %c160 = arith.constant 160 : index
    %c0_69 = arith.constant 0 : index
    %139 = vector.load %arg10[%c160, %c0_69] : memref<288x256xbf16, #tpu.memory_space<vmem>>, vector<32x256xbf16>
    tpu.vector_store %arg10[%c160, %c0_69], %138 {strides = array<i32>} : memref<288x256xbf16, #tpu.memory_space<vmem>>, vector<32x256xbf16>,
    %cst_70 = arith.constant 0.000000e+00 : f32
    %140 = vector.broadcast %cst_70 : f32 to vector<32x15xf32>
    %141 = vector.extract_strided_slice %97 {offsets = [0, 15], sizes = [32, 241], strides = [1, 1]} : vector<32x256xf32> to vector<32x241xf32>
    %142 = tpu.concatenate %141, %140 in 1 : vector<32x241xf32>, vector<32x15xf32> -> vector<32x256xf32>
    %c6_71 = arith.constant 6 : index
    %c0_72 = arith.constant 0 : index
    %143 = vector.load %arg3[%c6_71, %c0_72] : memref<9x256xf32, #tpu.memory_space<vmem>>, vector<1x256xf32>
    %144 = vector.broadcast %143 : vector<1x256xf32> to vector<32x256xf32>
    %145 = arith.mulf %142, %144 : vector<32x256xf32>
    %146 = arith.truncf %145 : vector<32x256xf32> to vector<32x256xbf16>
    %c192 = arith.constant 192 : index
    %c0_73 = arith.constant 0 : index
    %147 = vector.load %arg10[%c192, %c0_73] : memref<288x256xbf16, #tpu.memory_space<vmem>>, vector<32x256xbf16>
    tpu.vector_store %arg10[%c192, %c0_73], %146 {strides = array<i32>} : memref<288x256xbf16, #tpu.memory_space<vmem>>, vector<32x256xbf16>,
    %cst_74 = arith.constant 0.000000e+00 : f32
    %148 = vector.broadcast %cst_74 : f32 to vector<32x16xf32>
    %149 = vector.extract_strided_slice %97 {offsets = [0, 16], sizes = [32, 240], strides = [1, 1]} : vector<32x256xf32> to vector<32x240xf32>
    %150 = tpu.concatenate %149, %148 in 1 : vector<32x240xf32>, vector<32x16xf32> -> vector<32x256xf32>
    %c7_75 = arith.constant 7 : index
    %c0_76 = arith.constant 0 : index
    %151 = vector.load %arg3[%c7_75, %c0_76] : memref<9x256xf32, #tpu.memory_space<vmem>>, vector<1x256xf32>
    %152 = vector.broadcast %151 : vector<1x256xf32> to vector<32x256xf32>
    %153 = arith.mulf %150, %152 : vector<32x256xf32>
    %154 = arith.truncf %153 : vector<32x256xf32> to vector<32x256xbf16>
    %c224 = arith.constant 224 : index
    %c0_77 = arith.constant 0 : index
    %155 = vector.load %arg10[%c224, %c0_77] : memref<288x256xbf16, #tpu.memory_space<vmem>>, vector<32x256xbf16>
    tpu.vector_store %arg10[%c224, %c0_77], %154 {strides = array<i32>} : memref<288x256xbf16, #tpu.memory_space<vmem>>, vector<32x256xbf16>,
    %cst_78 = arith.constant 0.000000e+00 : f32
    %156 = vector.broadcast %cst_78 : f32 to vector<32x17xf32>
    %157 = vector.extract_strided_slice %97 {offsets = [0, 17], sizes = [32, 239], strides = [1, 1]} : vector<32x256xf32> to vector<32x239xf32>
    %158 = tpu.concatenate %157, %156 in 1 : vector<32x239xf32>, vector<32x17xf32> -> vector<32x256xf32>
    %c8_79 = arith.constant 8 : index
    %c0_80 = arith.constant 0 : index
    %159 = vector.load %arg3[%c8_79, %c0_80] : memref<9x256xf32, #tpu.memory_space<vmem>>, vector<1x256xf32>
    %160 = vector.broadcast %159 : vector<1x256xf32> to vector<32x256xf32>
    %161 = arith.mulf %158, %160 : vector<32x256xf32>
    %162 = arith.truncf %161 : vector<32x256xf32> to vector<32x256xbf16>
    %c256 = arith.constant 256 : index
    %c0_81 = arith.constant 0 : index
    %163 = vector.load %arg10[%c256, %c0_81] : memref<288x256xbf16, #tpu.memory_space<vmem>>, vector<32x256xbf16>
    tpu.vector_store %arg10[%c256, %c0_81], %162 {strides = array<i32>} : memref<288x256xbf16, #tpu.memory_space<vmem>>, vector<32x256xbf16>,
    %c0_82 = arith.constant 0 : index
    %c0_83 = arith.constant 0 : index
    %164 = vector.load %arg6[%c0_82, %c0_83] : memref<4x288xbf16, #tpu.memory_space<vmem>>, vector<4x288xbf16>
    %c0_84 = arith.constant 0 : index
    %c0_85 = arith.constant 0 : index
    %165 = vector.load %arg10[%c0_84, %c0_85] : memref<288x256xbf16, #tpu.memory_space<vmem>>, vector<288x256xbf16>
    %cst_86 = arith.constant dense<0.000000e+00> : vector<4x256xf32>
    %166 = tpu.matmul %164, %165, %cst_86 {dimension_numbers = #tpu.dot_dimension_numbers<[1], [0], [0], [1], [0, 0, 1, 1], [], []>} : vector<4x288xbf16>, vector<288x256xbf16>, vector<4x256xf32> -> vector<4x256xf32>
    %c0_87 = arith.constant 0 : index
    %c0_88 = arith.constant 0 : index
    %167 = vector.load %arg7[%c0_87, %c0_88] : memref<4x1xf32, #tpu.memory_space<vmem>>, vector<4x1xf32>
    %168 = vector.broadcast %167 : vector<4x1xf32> to vector<4x256xf32>
    %169 = arith.addf %166, %168 : vector<4x256xf32>
    %170 = arith.subf %3, %169 : vector<4x256xf32>
    %c0_89 = arith.constant 0 : index
    %c0_90 = arith.constant 0 : index
    %c0_91 = arith.constant 0 : index
    %171 = vector.load %arg8[%c0_89, %c0_90, %c0_91] : memref<1x4x256xf32, #tpu.memory_space<vmem>>, vector<1x4x256xf32>
    %172 = vector.shape_cast %171 : vector<1x4x256xf32> to vector<4x256xf32>
    %173 = vector.shape_cast %170 : vector<4x256xf32> to vector<1x4x256xf32>
    tpu.vector_store %arg8[%c0_89, %c0_90, %c0_91], %173 {strides = array<i32>} : memref<1x4x256xf32, #tpu.memory_space<vmem>>, vector<1x4x256xf32>,
    return
  }
  func.func @transform_0(%arg0: i32, %arg1: memref<2xf32, #tpu.memory_space<smem>>) -> (i32, i32, i32) {
    %c0_i32 = arith.constant 0 : i32
    %c0_i32_0 = arith.constant 0 : i32
    %c0_i32_1 = arith.constant 0 : i32
    return %arg0, %c0_i32, %c0_i32_0 : i32, i32, i32
  }
  func.func @transform_1(%arg0: i32, %arg1: memref<2xf32, #tpu.memory_space<smem>>) -> (i32, i32) {
    %c0_i32 = arith.constant 0 : i32
    %c0_i32_0 = arith.constant 0 : i32
    %c0_i32_1 = arith.constant 0 : i32
    return %c0_i32, %c0_i32_0 : i32, i32
  }
  func.func @transform_2(%arg0: i32, %arg1: memref<2xf32, #tpu.memory_space<smem>>) -> (i32, i32) {
    %c0_i32 = arith.constant 0 : i32
    %c0_i32_0 = arith.constant 0 : i32
    %c0_i32_1 = arith.constant 0 : i32
    return %c0_i32, %c0_i32_0 : i32, i32
  }
  func.func @transform_3(%arg0: i32, %arg1: memref<2xf32, #tpu.memory_space<smem>>) -> (i32, i32) {
    %c0_i32 = arith.constant 0 : i32
    %c0_i32_0 = arith.constant 0 : i32
    %c0_i32_1 = arith.constant 0 : i32
    return %c0_i32, %c0_i32_0 : i32, i32
  }
  func.func @transform_4(%arg0: i32, %arg1: memref<2xf32, #tpu.memory_space<smem>>) -> (i32, i32) {
    %c0_i32 = arith.constant 0 : i32
    %c0_i32_0 = arith.constant 0 : i32
    %c0_i32_1 = arith.constant 0 : i32
    return %c0_i32, %c0_i32_0 : i32, i32
  }
  func.func @transform_5(%arg0: i32, %arg1: memref<2xf32, #tpu.memory_space<smem>>) -> (i32, i32) {
    %c0_i32 = arith.constant 0 : i32
    %c0_i32_0 = arith.constant 0 : i32
    %c0_i32_1 = arith.constant 0 : i32
    return %c0_i32, %c0_i32_0 : i32, i32
  }
  func.func @transform_6(%arg0: i32, %arg1: memref<2xf32, #tpu.memory_space<smem>>) -> (i32, i32, i32) {
    %c0_i32 = arith.constant 0 : i32
    %c0_i32_0 = arith.constant 0 : i32
    %c0_i32_1 = arith.constant 0 : i32
    return %arg0, %c0_i32, %c0_i32_0 : i32, i32, i32
  }
}

</mosaic_0001>

<llo_original>
// kernel: _lambda_.1
$region0: #{_lambda_.1}
  #allocation0 [shape = 'u32[]', space=smem, size = 0x4, offset = 0x4, fixed_abs, tag = 'smem constant byte address 0x4 - core index']
  #allocation1 [shape = 'u32[144,128]{1,0:T(1,128)}', space=vmem, size = 0x12000, scoped, tag = 'internal scratch']
  #allocation2 [shape = 'f32[45,256]{1,0:T(8,128)}', space=vmem, size = 0xc000, scoped, tag = 'scratch operand']
  #allocation3 [shape = 'bf16[288,256]{1,0:T(8,128)(2,1)}', space=vmem, size = 0x24000, scoped, tag = 'scratch operand']
  #allocation4 [shape = 's32[1]{0}', space=sflag, size = 0x4, scoped, tag = 'scoped memory for _lambda_.1']
  #allocation5 [shape = 'u8[512]{0}', space=smem, size = 0x200, scoped, tag = 'prefetched SMEM operand 0']
  %s0 = inlined_call_operand.vmem [shape: f32[2], index: 0, kind: input, shape index: {}]
  %s1 = inlined_call_operand.vmem [shape: f32[2,4,256], index: 1, kind: input, shape index: {}]
  %s2 = inlined_call_operand.vmem [shape: f32[9,256], index: 2, kind: input, shape index: {}]
  %s3 = inlined_call_operand.vmem [shape: bf16[32,45], index: 3, kind: input, shape index: {}]
  %s4 = inlined_call_operand.vmem [shape: f32[32,1], index: 4, kind: input, shape index: {}]
  %s5 = inlined_call_operand.vmem [shape: bf16[4,288], index: 5, kind: input, shape index: {}]
  %s6 = inlined_call_operand.vmem [shape: f32[4,1], index: 6, kind: input, shape index: {}]
  %s7 = inlined_call_operand.vmem [shape: f32[2,4,256], index: 7, kind: output, shape index: {}]
  %s8 = sld [smem:[#allocation0]]
  $region57: #{_lambda_.1} parent=0
    _
  %s10 = ssub.s32 1, %s8
  %s11 = scalar_select 0, %s10, %s8
  %s12 = sshll.u32 %s0, 4
  %s13 = int_to_ptr.vmem [resolvable:$true] %s12
  %15 = dma.vmem_to_smem %s13, 16, [#allocation5], [#allocation4]
  %16 = dma.done [#allocation4], 16
  %17 = sfence
  loop: start=0, step=1, limit=4
  $region2: #{_lambda_.1} parent=0 // loop_pre_header
    _
  $region3: #{_lambda_.1} parent=0 // loop_header
    %s19 = sphi 0, %s23
    %p20 = scmp.ge.s32.totalorder %s19, 4
    %s29 = sphi 0, %s31
    %s32 = sphi 0, %s29
    %s33 = sphi 0, %s32
    %s49 = sphi 0, %s33
    %s53 = sphi 0, %s53
    %s55 = sphi 0, %s53
    %s56 = sphi 0, %s55
    %s70 = sphi 0, %s56
    %s74 = sphi 0, %s74
    %s76 = sphi 0, %s74
    %s77 = sphi 0, %s76
    %s91 = sphi 0, %s77
    %s95 = sphi 0, %s95
    %s97 = sphi 0, %s95
    %s98 = sphi 0, %s97
    %s112 = sphi 0, %s98
    %s116 = sphi 0, %s116
    %s118 = sphi 0, %s116
    %s119 = sphi 0, %s118
    %s133 = sphi 0, %s119
    %s137 = sphi 0, %s137
    %s139 = sphi 0, %s137
    %s140 = sphi 0, %s139
    %s154 = sphi 0, %s140
    %s160 = sphi 0, %s162
    %s163 = sphi 0, %s160
    %s164 = sphi 0, %s163
    %s180 = sphi 0, %s164
  $region4: #{_lambda_.1} parent=0 // loop_header_branch
    %22 = sbr.rel (%p20) target = $region8
  $region5: #{_lambda_.1} parent=0 // loop_body
    %s24 = ssub.s32 %s19, 1
    %s25 = ssub.s32 %s19, 2
    %s26 = sadd.s32 %s19, 1
    %s27 = ssub.s32 %s19, %s26
    %p28 = scmp.eq.s32.totalorder %s27, 0
    %s30 = sadd.s32 %s29, 1
    %s31 = scalar_select %p28, %s29, %s30
    %p34 = pneg %p28
    %p35 = scmp.eq.s32.totalorder %s19, 1
    %p36 = por %p34, %p35
    %p37 = scmp.ne.s32.totalorder %s29, %s32
    %p38 = scmp.eq.s32.totalorder %s19, 0
    %p39 = por %p37, %p38
    %p40 = scmp.ne.s32.totalorder %s29, %s32
    %p41 = scmp.eq.s32.totalorder %s24, 1
    %p42 = por %p40, %p41
    %p43 = scmp.ne.s32.totalorder %s32, %s33
    %p44 = scmp.eq.s32.totalorder %s24, 0
    %p45 = por %p43, %p44
    %p46 = scmp.ne.s32.totalorder %s32, %s33
    %p47 = scmp.eq.s32.totalorder %s25, 1
    %p48 = por %p46, %p47
    %p50 = scmp.ne.s32.totalorder %s33, %s49
    %p51 = scmp.eq.s32.totalorder %s25, 0
    %p52 = por %p50, %p51
    %s54 = sadd.s32 %s53, 1
    %p57 = scmp.eq.s32.totalorder %s19, 1
    %p58 = scmp.ne.s32.totalorder %s53, %s55
    %p59 = scmp.eq.s32.totalorder %s19, 0
    %p60 = por %p58, %p59
    %p61 = scmp.ne.s32.totalorder %s53, %s55
    %p62 = scmp.eq.s32.totalorder %s24, 1
    %p63 = por %p61, %p62
    %p64 = scmp.ne.s32.totalorder %s55, %s56
    %p65 = scmp.eq.s32.totalorder %s24, 0
    %p66 = por %p64, %p65
    %p67 = scmp.ne.s32.totalorder %s55, %s56
    %p68 = scmp.eq.s32.totalorder %s25, 1
    %p69 = por %p67, %p68
    %p71 = scmp.ne.s32.totalorder %s56, %s70
    %p72 = scmp.eq.s32.totalorder %s25, 0
    %p73 = por %p71, %p72
    %s75 = sadd.s32 %s74, 1
    %p78 = scmp.eq.s32.totalorder %s19, 1
    %p79 = scmp.ne.s32.totalorder %s74, %s76
    %p80 = scmp.eq.s32.totalorder %s19, 0
    %p81 = por %p79, %p80
    %p82 = scmp.ne.s32.totalorder %s74, %s76
    %p83 = scmp.eq.s32.totalorder %s24, 1
    %p84 = por %p82, %p83
    %p85 = scmp.ne.s32.totalorder %s76, %s77
    %p86 = scmp.eq.s32.totalorder %s24, 0
    %p87 = por %p85, %p86
    %p88 = scmp.ne.s32.totalorder %s76, %s77
    %p89 = scmp.eq.s32.totalorder %s25, 1
    %p90 = por %p88, %p89
    %p92 = scmp.ne.s32.totalorder %s77, %s91
    %p93 = scmp.eq.s32.totalorder %s25, 0
    %p94 = por %p92, %p93
    %s96 = sadd.s32 %s95, 1
    %p99 = scmp.eq.s32.totalorder %s19, 1
    %p100 = scmp.ne.s32.totalorder %s95, %s97
    %p101 = scmp.eq.s32.totalorder %s19, 0
    %p102 = por %p100, %p101
    %p103 = scmp.ne.s32.totalorder %s95, %s97
    %p104 = scmp.eq.s32.totalorder %s24, 1
    %p105 = por %p103, %p104
    %p106 = scmp.ne.s32.totalorder %s97, %s98
    %p107 = scmp.eq.s32.totalorder %s24, 0
    %p108 = por %p106, %p107
    %p109 = scmp.ne.s32.totalorder %s97, %s98
    %p110 = scmp.eq.s32.totalorder %s25, 1
    %p111 = por %p109, %p110
    %p113 = scmp.ne.s32.totalorder %s98, %s112
    %p114 = scmp.eq.s32.totalorder %s25, 0
    %p115 = por %p113, %p114
    %s117 = sadd.s32 %s116, 1
    %p120 = scmp.eq.s32.totalorder %s19, 1
    %p121 = scmp.ne.s32.totalorder %s116, %s118
    %p122 = scmp.eq.s32.totalorder %s19, 0
    %p123 = por %p121, %p122
    %p124 = scmp.ne.s32.totalorder %s116, %s118
    %p125 = scmp.eq.s32.totalorder %s24, 1
    %p126 = por %p124, %p125
    %p127 = scmp.ne.s32.totalorder %s118, %s119
    %p128 = scmp.eq.s32.totalorder %s24, 0
    %p129 = por %p127, %p128
    %p130 = scmp.ne.s32.totalorder %s118, %s119
    %p131 = scmp.eq.s32.totalorder %s25, 1
    %p132 = por %p130, %p131
    %p134 = scmp.ne.s32.totalorder %s119, %s133
    %p135 = scmp.eq.s32.totalorder %s25, 0
    %p136 = por %p134, %p135
    %s138 = sadd.s32 %s137, 1
    %p141 = scmp.eq.s32.totalorder %s19, 1
    %p142 = scmp.ne.s32.totalorder %s137, %s139
    %p143 = scmp.eq.s32.totalorder %s19, 0
    %p144 = por %p142, %p143
    %p145 = scmp.ne.s32.totalorder %s137, %s139
    %p146 = scmp.eq.s32.totalorder %s24, 1
    %p147 = por %p145, %p146
    %p148 = scmp.ne.s32.totalorder %s139, %s140
    %p149 = scmp.eq.s32.totalorder %s24, 0
    %p150 = por %p148, %p149
    %p151 = scmp.ne.s32.totalorder %s139, %s140
    %p152 = scmp.eq.s32.totalorder %s25, 1
    %p153 = por %p151, %p152
    %p155 = scmp.ne.s32.totalorder %s140, %s154
    %p156 = scmp.eq.s32.totalorder %s25, 0
    %p157 = por %p155, %p156
    %s158 = ssub.s32 %s19, %s26
    %p159 = scmp.eq.s32.totalorder %s158, 0
    %s161 = sadd.s32 %s160, 1
    %s162 = scalar_select %p159, %s160, %s161
    %p165 = pneg %p159
    %p166 = scmp.eq.s32.totalorder %s19, 1
    %p167 = por %p165, %p166
    %p168 = scmp.ne.s32.totalorder %s160, %s163
    %p169 = scmp.eq.s32.totalorder %s19, 0
    %p170 = por %p168, %p169
    %p171 = scmp.ne.s32.totalorder %s160, %s163
    %p172 = scmp.eq.s32.totalorder %s24, 1
    %p173 = por %p171, %p172
    %p174 = scmp.ne.s32.totalorder %s163, %s164
    %p175 = scmp.eq.s32.totalorder %s24, 0
    %p176 = por %p174, %p175
    %p177 = scmp.ne.s32.totalorder %s163, %s164
    %p178 = scmp.eq.s32.totalorder %s25, 1
    %p179 = por %p177, %p178
    %p181 = scmp.ne.s32.totalorder %s164, %s180
    %p182 = scmp.eq.s32.totalorder %s25, 0
    %p183 = por %p181, %p182
    %p184 = scmp.le.s32.totalorder 1, %s19
    %p185 = scmp.lt.s32.totalorder %s19, 3
    %p186 = pnand %p184, %p185
    %p187 = pneg %p186
    // Predicated region
    $region9: #{_lambda_.1} parent=5 // pred_check
      _
    $region10: #{_lambda_.1} parent=5 // pred_check_branch
      %189 = sbr.rel (%p186) target = $region12
    $region11: #{_lambda_.1} parent=5 // pred_region
      %s190 = ssub.s32 %s19, 1
      // Predicated region
      $region13: #{_lambda_.1} parent=11 // pred_check
        %p191 = pneg %p66
      $region14: #{_lambda_.1} parent=11 // pred_check_branch
        %193 = sbr.rel (%p191) target = $region16
      $region15: #{_lambda_.1} parent=11 // pred_region
        _
      $region16: #{_lambda_.1} parent=11 // pred_fallthru
        _
      // Predicated region
      $region17: #{_lambda_.1} parent=11 // pred_check
        %p194 = pneg %p87
      $region18: #{_lambda_.1} parent=11 // pred_check_branch
        %196 = sbr.rel (%p194) target = $region20
      $region19: #{_lambda_.1} parent=11 // pred_region
        _
      $region20: #{_lambda_.1} parent=11 // pred_fallthru
        _
      // Predicated region
      $region21: #{_lambda_.1} parent=11 // pred_check
        %p197 = pneg %p108
      $region22: #{_lambda_.1} parent=11 // pred_check_branch
        %199 = sbr.rel (%p197) target = $region24
      $region23: #{_lambda_.1} parent=11 // pred_region
        _
      $region24: #{_lambda_.1} parent=11 // pred_fallthru
        _
      // Predicated region
      $region25: #{_lambda_.1} parent=11 // pred_check
        %p200 = pneg %p129
      $region26: #{_lambda_.1} parent=11 // pred_check_branch
        %202 = sbr.rel (%p200) target = $region28
      $region27: #{_lambda_.1} parent=11 // pred_region
        _
      $region28: #{_lambda_.1} parent=11 // pred_fallthru
        _
      // Predicated region
      $region29: #{_lambda_.1} parent=11 // pred_check
        %p203 = pneg %p150
      $region30: #{_lambda_.1} parent=11 // pred_check_branch
        %205 = sbr.rel (%p203) target = $region32
      $region31: #{_lambda_.1} parent=11 // pred_region
        _
      $region32: #{_lambda_.1} parent=11 // pred_fallthru
        _
    $region12: #{_lambda_.1} parent=5 // pred_fallthru
      _
    %p206 = scmp.lt.s32.totalorder %s19, 2
    // Predicated region
    $region33: #{_lambda_.1} parent=5 // pred_check
      %p207 = pneg %p206
    $region34: #{_lambda_.1} parent=5 // pred_check_branch
      %209 = sbr.rel (%p207) target = $region36
    $region35: #{_lambda_.1} parent=5 // pred_region
      // Predicated region
      $region37: #{_lambda_.1} parent=35 // pred_check
        %p210 = pneg %p39
      $region38: #{_lambda_.1} parent=35 // pred_check_branch
        %212 = sbr.rel (%p210) target = $region40
      $region39: #{_lambda_.1} parent=35 // pred_region
        %p213 = scmp.lt.s32.totalorder %s19, 1
        %s214 = scalar_select %p213, %s19, 1
        %s215 = smul.addr %s214, 2
        %s216 = smul.addr %s215, 4
        %s217 = scalar_lea.vmem %s1, %s216
      $region40: #{_lambda_.1} parent=35 // pred_fallthru
        _
    $region36: #{_lambda_.1} parent=5 // pred_fallthru
      _
    %p218 = scmp.le.s32.totalorder 1, %s19
    %p219 = scmp.lt.s32.totalorder %s19, 3
    %p220 = pnand %p218, %p219
    %p221 = pneg %p220
    // Predicated region
    $region41: #{_lambda_.1} parent=5 // pred_check
      _
    $region42: #{_lambda_.1} parent=5 // pred_check_branch
      %223 = sbr.rel (%p220) target = $region44
    $region43: #{_lambda_.1} parent=5 // pred_region
      %s224 = ssub.s32 %s19, 1
      %p225 = scmp.lt.s32.totalorder %s24, 1
      %s226 = scalar_select %p225, %s24, 1
      %s227 = smul.addr %s226, 2
      %s228 = smul.addr %s227, 4
      %s229 = scalar_lea.vmem %s1, %s228
      %p230 = pneg %p45
      %p231 = pneg %p42
      %p232 = pneg %p66
      %p233 = pneg %p63
      %p234 = pneg %p87
      %p235 = pneg %p84
      %p236 = pneg %p108
      %p237 = pneg %p105
      %p238 = pneg %p129
      %p239 = pneg %p126
      %p240 = pneg %p150
      %p241 = pneg %p147
      %p242 = pneg %p176
      %p243 = pneg %p173
      %p244 = scmp.lt.s32.totalorder %s24, 1
      %s245 = scalar_select %p244, %s24, 1
      %s246 = smul.addr %s245, 2
      %s247 = smul.addr %s246, 4
      %s248 = scalar_lea.vmem %s7, %s247
      %p249 = scmp.lt.s32.totalorder %s24, 1
      %s250 = scalar_select %p249, %s24, 1
      %s251 = smul.addr %s250, 2
      %s252 = smul.addr %s251, 4
      %s253 = scalar_lea.vmem %s1, %s252
      %p254 = scmp.lt.s32.totalorder %s24, 1
      %s255 = scalar_select %p254, %s24, 1
      %s256 = smul.addr %s255, 2
      %s257 = smul.addr %s256, 4
      %s258 = scalar_lea.vmem %s7, %s257
      %s260 = sld [smem:[#allocation5 + %s24]]
      %v261 = vld [vmem:[%s253] sm:$0xff]
      %v262 = vld [vmem:[%s2] ss:$8 sm:$0x3]
      %v264 = vcombine.high %v261, %v261
      %265 = vrot.lane.b32.xlu0 %v261, 17
      %v266 = vpop.permute.xlu0 %265
      %267 = vrot.lane.b32.xlu0 %v264, 17
      %v268 = vpop.permute.xlu0 %267
      %vm269 = vcmask 138240
      %v270 = vsel %vm269, %v266, %v268
      %v273 = vsel %vm269, 0.0, %v266
      %v275 = vlaneseq
      %v276 = vshrl.u32 %v275, 7
      %v277 = vsub.s32 0, %v276
      %v278 = vrot.slane %v262, %v277
      %v279 = vlaneseq
      %v280 = vshrl.u32 %v279, 7
      %v281 = vsub.s32 1, %v280
      %v282 = vrot.slane %v262, %v281
      %v285 = vmul.f32 %v273, %v278
      %v286 = vmul.f32 %v270, %v282
      %287 = vst [vmem:[#allocation2] sm:$0xf] %v285
      %288 = vst [vmem:[#allocation2 + $0x8] sm:$0xf] %v286
      %v289 = vstv %s260
      %v290 = vmul.f32 %v289, %v262
      %v291 = vlaneseq
      %vm292 = vcmp.ge.s32.totalorder %v291, 0
      %vm293 = vcmp.lt.s32.totalorder %v291, 256
      %vm294 = vmand %vm292, %vm293
      %s295 = scalar_lea.vmem [#allocation2], 4
      %296 = vst.msk [vmem:[%s295] ss:$8 sm:$0x3] %vm294, %v290
      %297 = vst.msk [vmem:[%s295] ss:$8 sm:$0x0] %vm294, %v290
      %s298 = scalar_lea.vmem %s2, 1
      %v299 = vld [vmem:[%s298] ss:$8 sm:$0x3]
      %300 = vrot.lane.b32.xlu0 %v261, 16
      %v301 = vpop.permute.xlu0 %300
      %302 = vrot.lane.b32.xlu0 %v264, 16
      %v303 = vpop.permute.xlu0 %302
      %vm304 = vcmask 130048
      %v305 = vsel %vm304, %v301, %v303
      %v308 = vsel %vm304, 0.0, %v301
      %v310 = vlaneseq
      %v311 = vshrl.u32 %v310, 7
      %v312 = vsub.s32 0, %v311
      %v313 = vrot.slane %v299, %v312
      %v314 = vlaneseq
      %v315 = vshrl.u32 %v314, 7
      %v316 = vsub.s32 1, %v315
      %v317 = vrot.slane %v299, %v316
      %v320 = vmul.f32 %v308, %v313
      %v321 = vmul.f32 %v305, %v317
      %v324 = vrot.slane %v320, 3
      %v325 = vrot.slane %v321, 3
      %328 = vst [vmem:[#allocation2] sm:$0xe0] %v324
      %329 = vst [vmem:[#allocation2 + $0x8] sm:$0xe0] %v325
      %330 = vst [vmem:[#allocation2 + $0x10] sm:$0x1] %v324
      %331 = vst [vmem:[#allocation2 + $0x18] sm:$0x1] %v325
      %v332 = vmul.f32 %v289, %v299
      %s333 = scalar_lea.vmem [#allocation2], 17
      %334 = vst.msk [vmem:[%s333] ss:$8 sm:$0x3] %vm294, %v332
      %335 = vst.msk [vmem:[%s333] ss:$8 sm:$0x0] %vm294, %v332
      %s336 = scalar_lea.vmem %s2, 2
      %v337 = vld [vmem:[%s336] ss:$8 sm:$0x3]
      %338 = vrot.lane.b32.xlu0 %v261, 15
      %v339 = vpop.permute.xlu0 %338
      %340 = vrot.lane.b32.xlu0 %v264, 15
      %v341 = vpop.permute.xlu0 %340
      %vm342 = vcmask 121856
      %v343 = vsel %vm342, %v339, %v341
      %v346 = vsel %vm342, 0.0, %v339
      %v348 = vlaneseq
      %v349 = vshrl.u32 %v348, 7
      %v350 = vsub.s32 0, %v349
      %v351 = vrot.slane %v337, %v350
      %v352 = vlaneseq
      %v353 = vshrl.u32 %v352, 7
      %v354 = vsub.s32 1, %v353
      %v355 = vrot.slane %v337, %v354
      %v358 = vmul.f32 %v346, %v351
      %v359 = vmul.f32 %v343, %v355
      %v362 = vrot.slane %v358, 6
      %v363 = vrot.slane %v359, 6
      %366 = vst [vmem:[#allocation2 + $0x10] sm:$0x3c] %v362
      %367 = vst [vmem:[#allocation2 + $0x18] sm:$0x3c] %v363
      %v368 = vmul.f32 %v289, %v337
      %s369 = scalar_lea.vmem [#allocation2], 22
      %370 = vst.msk [vmem:[%s369] ss:$8 sm:$0x3] %vm294, %v368
      %371 = vst.msk [vmem:[%s369] ss:$8 sm:$0x0] %vm294, %v368
      %s372 = scalar_lea.vmem %s2, 3
      %v373 = vld [vmem:[%s372] ss:$8 sm:$0x3]
      %374 = vrot.lane.b32.xlu0 %v261, 1
      %v375 = vpop.permute.xlu0 %374
      %376 = vrot.lane.b32.xlu0 %v264, 1
      %v377 = vpop.permute.xlu0 %376
      %vm378 = vcmask 7168
      %v379 = vsel %vm378, %v375, %v377
      %v382 = vsel %vm378, 0.0, %v375
      %v384 = vlaneseq
      %v385 = vshrl.u32 %v384, 7
      %v386 = vsub.s32 0, %v385
      %v387 = vrot.slane %v373, %v386
      %v388 = vlaneseq
      %v389 = vshrl.u32 %v388, 7
      %v390 = vsub.s32 1, %v389
      %v391 = vrot.slane %v373, %v390
      %v394 = vmul.f32 %v382, %v387
      %v395 = vmul.f32 %v379, %v391
      %v398 = vrot.slane %v394, 1
      %v399 = vrot.slane %v395, 1
      %402 = vst [vmem:[#allocation2 + $0x10] sm:$0x80] %v398
      %403 = vst [vmem:[#allocation2 + $0x18] sm:$0x80] %v399
      %404 = vst [vmem:[#allocation2 + $0x20] sm:$0x7] %v398
      %405 = vst [vmem:[#allocation2 + $0x28] sm:$0x7] %v399
      %v406 = vmul.f32 %v289, %v373
      %s407 = scalar_lea.vmem [#allocation2], 35
      %408 = vst.msk [vmem:[%s407] ss:$8 sm:$0x3] %vm294, %v406
      %409 = vst.msk [vmem:[%s407] ss:$8 sm:$0x0] %vm294, %v406
      %s410 = scalar_lea.vmem %s2, 4
      %v411 = vld [vmem:[%s410] ss:$8 sm:$0x3]
      %v412 = vcombine.low %v261, %v261
      %414 = vst [vmem:[#allocation2 + $0x20] sm:$0xf0] %v412
      %415 = vst [vmem:[#allocation2 + $0x28] sm:$0xf0] %v261
      %v416 = vmul.f32 %v289, %v411
      %s417 = scalar_lea.vmem [#allocation2], 48
      %418 = vst.msk [vmem:[%s417] ss:$8 sm:$0x3] %vm294, %v416
      %419 = vst.msk [vmem:[%s417] ss:$8 sm:$0x0] %vm294, %v416
      %s420 = scalar_lea.vmem %s2, 5
      %v421 = vld [vmem:[%s420] ss:$8 sm:$0x3]
      %422 = vrot.lane.b32.xlu0 %v261, 127
      %v423 = vpop.permute.xlu0 %422
      %424 = vrot.lane.b32.xlu0 %v264, 127
      %v425 = vpop.permute.xlu0 %424
      %vm426 = vcmask 1039360
      %v427 = vsel %vm426, %v423, %v425
      %v430 = vsel %vm426, %v425, 0.0
      %v432 = vlaneseq
      %v433 = vshrl.u32 %v432, 7
      %v434 = vsub.s32 0, %v433
      %v435 = vrot.slane %v421, %v434
      %v436 = vlaneseq
      %v437 = vshrl.u32 %v436, 7
      %v438 = vsub.s32 1, %v437
      %v439 = vrot.slane %v421, %v438
      %v442 = vmul.f32 %v427, %v435
      %v443 = vmul.f32 %v430, %v439
      %v446 = vrot.slane %v442, 7
      %v447 = vrot.slane %v443, 7
      %450 = vst [vmem:[#allocation2 + $0x30] sm:$0x1e] %v446
      %451 = vst [vmem:[#allocation2 + $0x38] sm:$0x1e] %v447
      %v452 = vmul.f32 %v289, %v421
      %s453 = scalar_lea.vmem [#allocation2], 53
      %454 = vst.msk [vmem:[%s453] ss:$8 sm:$0x3] %vm294, %v452
      %455 = vst.msk [vmem:[%s453] ss:$8 sm:$0x0] %vm294, %v452
      %s456 = scalar_lea.vmem %s2, 6
      %v457 = vld [vmem:[%s456] ss:$8 sm:$0x3]
      %458 = vrot.lane.b32.xlu0 %v261, 113
      %v459 = vpop.permute.xlu0 %458
      %460 = vrot.lane.b32.xlu0 %v264, 113
      %v461 = vpop.permute.xlu0 %460
      %vm462 = vcmask 924672
      %v463 = vsel %vm462, %v459, %v461
      %v466 = vsel %vm462, %v461, 0.0
      %v468 = vlaneseq
      %v469 = vshrl.u32 %v468, 7
      %v470 = vsub.s32 0, %v469
      %v471 = vrot.slane %v457, %v470
      %v472 = vlaneseq
      %v473 = vshrl.u32 %v472, 7
      %v474 = vsub.s32 1, %v473
      %v475 = vrot.slane %v457, %v474
      %v478 = vmul.f32 %v463, %v471
      %v479 = vmul.f32 %v466, %v475
      %v482 = vrot.slane %v478, 2
      %v483 = vrot.slane %v479, 2
      %486 = vst [vmem:[#allocation2 + $0x30] sm:$0xc0] %v482
      %487 = vst [vmem:[#allocation2 + $0x38] sm:$0xc0] %v483
      %488 = vst [vmem:[#allocation2 + $0x40] sm:$0x3] %v482
      %489 = vst [vmem:[#allocation2 + $0x48] sm:$0x3] %v483
      %v490 = vmul.f32 %v289, %v457
      %s491 = scalar_lea.vmem [#allocation2], 66
      %492 = vst.msk [vmem:[%s491] ss:$8 sm:$0x3] %vm294, %v490
      %493 = vst.msk [vmem:[%s491] ss:$8 sm:$0x0] %vm294, %v490
      %s494 = scalar_lea.vmem %s2, 7
      %v495 = vld [vmem:[%s494] ss:$8 sm:$0x3]
      %496 = vrot.lane.b32.xlu0 %v261, 112
      %v497 = vpop.permute.xlu0 %496
      %498 = vrot.lane.b32.xlu0 %v264, 112
      %v499 = vpop.permute.xlu0 %498
      %vm500 = vcmask 916480
      %v501 = vsel %vm500, %v497, %v499
      %v504 = vsel %vm500, %v499, 0.0
      %v506 = vlaneseq
      %v507 = vshrl.u32 %v506, 7
      %v508 = vsub.s32 0, %v507
      %v509 = vrot.slane %v495, %v508
      %v510 = vlaneseq
      %v511 = vshrl.u32 %v510, 7
      %v512 = vsub.s32 1, %v511
      %v513 = vrot.slane %v495, %v512
      %v516 = vmul.f32 %v501, %v509
      %v517 = vmul.f32 %v504, %v513
      %v520 = vrot.slane %v516, 5
      %v521 = vrot.slane %v517, 5
      %524 = vst [vmem:[#allocation2 + $0x40] sm:$0x78] %v520
      %525 = vst [vmem:[#allocation2 + $0x48] sm:$0x78] %v521
      %v526 = vmul.f32 %v289, %v495
      %s527 = scalar_lea.vmem [#allocation2], 71
      %528 = vst.msk [vmem:[%s527] ss:$8 sm:$0x3] %vm294, %v526
      %529 = vst.msk [vmem:[%s527] ss:$8 sm:$0x0] %vm294, %v526
      %s530 = scalar_lea.vmem %s2, 16
      %v531 = vld [vmem:[%s530] ss:$8 sm:$0x3]
      %532 = vrot.lane.b32.xlu0 %v261, 111
      %v533 = vpop.permute.xlu0 %532
      %534 = vrot.lane.b32.xlu0 %v264, 111
      %v535 = vpop.permute.xlu0 %534
      %vm536 = vcmask 908288
      %v537 = vsel %vm536, %v533, %v535
      %v540 = vsel %vm536, %v535, 0.0
      %v542 = vlaneseq
      %v543 = vshrl.u32 %v542, 7
      %v544 = vsub.s32 0, %v543
      %v545 = vrot.slane %v531, %v544
      %v546 = vlaneseq
      %v547 = vshrl.u32 %v546, 7
      %v548 = vsub.s32 1, %v547
      %v549 = vrot.slane %v531, %v548
      %v552 = vmul.f32 %v537, %v545
      %v553 = vmul.f32 %v540, %v549
      %554 = vst [vmem:[#allocation2 + $0x50] sm:$0xf] %v552
      %555 = vst [vmem:[#allocation2 + $0x58] sm:$0xf] %v553
      %v556 = vmul.f32 %v289, %v531
      %s557 = scalar_lea.vmem [#allocation2], 84
      %558 = vst.msk [vmem:[%s557] ss:$8 sm:$0x3] %vm294, %v556
      %559 = vst.msk [vmem:[%s557] ss:$8 sm:$0x0] %vm294, %v556
      %v560 = vld [vmem:[%s3] sm:$0xf]
      %v561 = vld [vmem:[%s3 + $0x4] sm:$0xf]
      %v562 = vld [vmem:[%s3 + $0x8] sm:$0xf]
      %v563 = vld [vmem:[%s3 + $0xc] sm:$0xf]
      %v564 = vld [vmem:[#allocation2] sm:$0xff]
      %v565 = vld [vmem:[#allocation2 + $0x8] sm:$0xff]
      %v566 = vld [vmem:[#allocation2 + $0x10] sm:$0xff]
      %v567 = vld [vmem:[#allocation2 + $0x18] sm:$0xff]
      %v568 = vld [vmem:[#allocation2 + $0x20] sm:$0xff]
      %v569 = vld [vmem:[#allocation2 + $0x28] sm:$0xff]
      %v570 = vld [vmem:[#allocation2 + $0x30] sm:$0xff]
      %v571 = vld [vmem:[#allocation2 + $0x38] sm:$0xff]
      %v572 = vld [vmem:[#allocation2 + $0x40] sm:$0xff]
      %v573 = vld [vmem:[#allocation2 + $0x48] sm:$0xff]
      %v574 = vld [vmem:[#allocation2 + $0x50] sm:$0x1f]
      %v575 = vld [vmem:[#allocation2 + $0x58] sm:$0x1f]
      %v576 = vpack.c.bf16 %v566, %v564
      %v577 = vpack.c.bf16 %v567, %v565
      %v578 = vpack.c.bf16 %v570, %v568
      %v579 = vpack.c.bf16 %v571, %v569
      %v580 = vpack.c.bf16 %v574, %v572
      %v581 = vpack.c.bf16 %v575, %v573
      %v582 = vld [vmem:[%s4] sm:$0xff]
      %v583 = vld [vmem:[%s4 + $0x8] sm:$0xff]
      %v584 = vld [vmem:[%s4 + $0x10] sm:$0xff]
      %v585 = vld [vmem:[%s4 + $0x18] sm:$0xff]
      %587 = vset.pattern.permute.xlu0 0
      %588 = vperm.xlu0 %587, %v582
      %v589 = vpop.permute.xlu0 %588
      %592 = vset.pattern.permute.xlu0 0
      %593 = vperm.xlu0 %592, %v583
      %v594 = vpop.permute.xlu0 %593
      %597 = vset.pattern.permute.xlu0 0
      %598 = vperm.xlu0 %597, %v584
      %v599 = vpop.permute.xlu0 %598
      %602 = vset.pattern.permute.xlu0 0
      %603 = vperm.xlu0 %602, %v585
      %v604 = vpop.permute.xlu0 %603
      %v610 = vunpack.c.l.b16 %v560
      %v611 = vunpack.c.l.b16 %v561
      %v612 = vunpack.c.l.b16 %v562
      %v613 = vunpack.c.l.b16 %v563
      %v614 = vpack.c.b16 %v611, %v610
      %v615 = vpack.c.b16 %v613, %v612
      %vm616 = vcmask 367616
      %v618 = vsel %vm616, %v614, 0
      %v621 = vsel %vm616, %v615, 0
      %vm623 = vcmask 1045504
      %vm624 = vcmask 1046528
      %v625 = vsel %vm623, 4294967295, 65535
      %v626 = vsel %vm624, %v625, 0
      %v628 = vand.u32 %v580, %v626
      %v631 = vand.u32 %v581, %v626
      %633 = vmatprep.subr.bf16.mxu0 0
      %634 = vmatpush1.bf16.msra.mxu0 0
      %635 = vmatprep.subr.bf16.mxu0 0
      %636 = vmatpush1.bf16.msra.mxu0 0
      %637 = vmatprep.subr.bf16.mxu0 0
      %638 = vmatpush1.bf16.msra.mxu0 0
      %639 = vmatprep.subr.bf16.mxu0 0
      %640 = vmatpush1.bf16.msra.mxu0 0
      %641 = vmatprep.subr.bf16.mxu0 0
      %642 = vmatpush1.bf16.msra.mxu0 0
      %643 = vmatprep.subr.bf16.mxu0 %v631
      %644 = vmatpush1.bf16.msra.mxu0 %v628
      %645 = vmatprep.subr.bf16.mxu0 %v579
      %646 = vmatpush1.bf16.msra.mxu0 %v578
      %647 = vmatprep.subr.bf16.mxu0 %v577
      %648 = vmatpush1.bf16.msra.mxu0 %v576
      %649 = vmatprep.subr.bf16.mxu0 0
      %650 = vmatpush2.bf16.msra.mxu0 0
      %651 = vmatprep.subr.bf16.mxu0 0
      %652 = vmatpush2.bf16.msra.mxu0 0
      %653 = vmatprep.subr.bf16.mxu0 0
      %654 = vmatpush2.bf16.msra.mxu0 0
      %655 = vmatprep.subr.bf16.mxu0 0
      %656 = vmatpush2.bf16.msra.mxu0 0
      %657 = vmatprep.subr.bf16.mxu0 0
      %658 = vmatpush2.bf16.msra.mxu0 0
      %659 = vmatprep.subr.bf16.mxu0 0
      %660 = vmatpush2.bf16.msra.mxu0 0
      %661 = vmatprep.subr.bf16.mxu0 0
      %662 = vmatpush2.bf16.msra.mxu0 0
      %663 = vmatprep.subr.bf16.mxu0 0
      %664 = vmatpush2.bf16.msra.mxu0 0
      %665 = vmatprep.mubr.bf16.mxu0 0
      %666 = vmatmul.mubr.bf16.gmra.mxu0 %v618
      %v667 = vpop.f32.mrf.mxu0
      %v668 = vadd.f32 %v589, %v667
      %v669 = vpop.f32.mrf.mxu0
      %v670 = vadd.f32 %v589, %v669
      %v671 = vpop.f32.mrf.mxu0
      %v672 = vadd.f32 %v594, %v671
      %v673 = vpop.f32.mrf.mxu0
      %v674 = vadd.f32 %v594, %v673
      %675 = vmatprep.mubr.bf16.mxu0 0
      %676 = vmatmul.mubr.bf16.gmra.mxu0 %v621
      %v677 = vpop.f32.mrf.mxu0
      %v678 = vadd.f32 %v599, %v677
      %v679 = vpop.f32.mrf.mxu0
      %v680 = vadd.f32 %v599, %v679
      %v681 = vpop.f32.mrf.mxu0
      %v682 = vadd.f32 %v604, %v681
      %v683 = vpop.f32.mrf.mxu0
      %v684 = vadd.f32 %v604, %v683
      %685 = vdwg.mxu0
      %v686 = vmax.f32 %v668, 0.0
      %v687 = vmax.f32 %v670, 0.0
      %v688 = vmax.f32 %v672, 0.0
      %v689 = vmax.f32 %v674, 0.0
      %v690 = vmax.f32 %v678, 0.0
      %v691 = vmax.f32 %v680, 0.0
      %v692 = vmax.f32 %v682, 0.0
      %v693 = vmax.f32 %v684, 0.0
      %702 = vrot.lane.b32.xlu0 %v686, 17
      %v703 = vpop.permute.xlu0 %702
      %704 = vrot.lane.b32.xlu0 %v687, 17
      %v705 = vpop.permute.xlu0 %704
      %706 = vrot.lane.b32.xlu0 %v688, 17
      %v707 = vpop.permute.xlu0 %706
      %708 = vrot.lane.b32.xlu0 %v689, 17
      %v709 = vpop.permute.xlu0 %708
      %710 = vrot.lane.b32.xlu0 %v690, 17
      %v711 = vpop.permute.xlu0 %710
      %712 = vrot.lane.b32.xlu0 %v691, 17
      %v713 = vpop.permute.xlu0 %712
      %714 = vrot.lane.b32.xlu0 %v692, 17
      %v715 = vpop.permute.xlu0 %714
      %716 = vrot.lane.b32.xlu0 %v693, 17
      %v717 = vpop.permute.xlu0 %716
      %v718 = vsel %vm269, %v703, %v705
      %v719 = vsel %vm269, %v707, %v709
      %v720 = vsel %vm269, %v711, %v713
      %v721 = vsel %vm269, %v715, %v717
      %v730 = vsel %vm269, 0.0, %v703
      %v731 = vsel %vm269, 0.0, %v707
      %v732 = vsel %vm269, 0.0, %v711
      %v733 = vsel %vm269, 0.0, %v715
      %v734 = vld [vmem:[%s2] ss:$8 sm:$0x3]
      %v736 = vlaneseq
      %v737 = vshrl.u32 %v736, 7
      %v738 = vsub.s32 0, %v737
      %v739 = vrot.slane %v734, %v738
      %v740 = vlaneseq
      %v741 = vshrl.u32 %v740, 7
      %v742 = vsub.s32 1, %v741
      %v743 = vrot.slane %v734, %v742
      %v746 = vmul.f32 %v730, %v739
      %v747 = vmul.f32 %v718, %v743
      %v748 = vmul.f32 %v731, %v739
      %v749 = vmul.f32 %v719, %v743
      %v750 = vmul.f32 %v732, %v739
      %v751 = vmul.f32 %v720, %v743
      %v752 = vmul.f32 %v733, %v739
      %v753 = vmul.f32 %v721, %v743
      %v754 = vpack.c.bf16 %v748, %v746
      %v755 = vpack.c.bf16 %v749, %v747
      %v756 = vpack.c.bf16 %v752, %v750
      %v757 = vpack.c.bf16 %v753, %v751
      %v762 = vunpack.c.l.b16 %v754
      %v763 = vunpack.c.l.b16 %v755
      %v764 = vunpack.c.h.b16 %v754
      %v765 = vunpack.c.h.b16 %v755
      %v766 = vunpack.c.l.b16 %v756
      %v767 = vunpack.c.l.b16 %v757
      %v768 = vunpack.c.h.b16 %v756
      %v769 = vunpack.c.h.b16 %v757
      %v770 = vpack.c.b16 %v763, %v762
      %v771 = vpack.c.b16 %v765, %v764
      %v772 = vpack.c.b16 %v767, %v766
      %v773 = vpack.c.b16 %v769, %v768
      %778 = vst [vmem:[#allocation3] sm:$0xff] %v770
      %779 = vst [vmem:[#allocation3 + $0x8] sm:$0xff] %v771
      %780 = vst [vmem:[#allocation3 + $0x10] sm:$0xff] %v772
      %781 = vst [vmem:[#allocation3 + $0x18] sm:$0xff] %v773
      %782 = vrot.lane.b32.xlu0 %v686, 16
      %v783 = vpop.permute.xlu0 %782
      %784 = vrot.lane.b32.xlu0 %v687, 16
      %v785 = vpop.permute.xlu0 %784
      %786 = vrot.lane.b32.xlu0 %v688, 16
      %v787 = vpop.permute.xlu0 %786
      %788 = vrot.lane.b32.xlu0 %v689, 16
      %v789 = vpop.permute.xlu0 %788
      %790 = vrot.lane.b32.xlu0 %v690, 16
      %v791 = vpop.permute.xlu0 %790
      %792 = vrot.lane.b32.xlu0 %v691, 16
      %v793 = vpop.permute.xlu0 %792
      %794 = vrot.lane.b32.xlu0 %v692, 16
      %v795 = vpop.permute.xlu0 %794
      %796 = vrot.lane.b32.xlu0 %v693, 16
      %v797 = vpop.permute.xlu0 %796
      %v798 = vsel %vm304, %v783, %v785
      %v799 = vsel %vm304, %v787, %v789
      %v800 = vsel %vm304, %v791, %v793
      %v801 = vsel %vm304, %v795, %v797
      %v810 = vsel %vm304, 0.0, %v783
      %v811 = vsel %vm304, 0.0, %v787
      %v812 = vsel %vm304, 0.0, %v791
      %v813 = vsel %vm304, 0.0, %v795
      %v814 = vld [vmem:[%s298] ss:$8 sm:$0x3]
      %v816 = vlaneseq
      %v817 = vshrl.u32 %v816, 7
      %v818 = vsub.s32 0, %v817
      %v819 = vrot.slane %v814, %v818
      %v820 = vlaneseq
      %v821 = vshrl.u32 %v820, 7
      %v822 = vsub.s32 1, %v821
      %v823 = vrot.slane %v814, %v822
      %v826 = vmul.f32 %v810, %v819
      %v827 = vmul.f32 %v798, %v823
      %v828 = vmul.f32 %v811, %v819
      %v829 = vmul.f32 %v799, %v823
      %v830 = vmul.f32 %v812, %v819
      %v831 = vmul.f32 %v800, %v823
      %v832 = vmul.f32 %v813, %v819
      %v833 = vmul.f32 %v801, %v823
      %v834 = vpack.c.bf16 %v828, %v826
      %v835 = vpack.c.bf16 %v829, %v827
      %v836 = vpack.c.bf16 %v832, %v830
      %v837 = vpack.c.bf16 %v833, %v831
      %v842 = vunpack.c.l.b16 %v834
      %v843 = vunpack.c.l.b16 %v835
      %v844 = vunpack.c.h.b16 %v834
      %v845 = vunpack.c.h.b16 %v835
      %v846 = vunpack.c.l.b16 %v836
      %v847 = vunpack.c.l.b16 %v837
      %v848 = vunpack.c.h.b16 %v836
      %v849 = vunpack.c.h.b16 %v837
      %v850 = vpack.c.b16 %v843, %v842
      %v851 = vpack.c.b16 %v845, %v844
      %v852 = vpack.c.b16 %v847, %v846
      %v853 = vpack.c.b16 %v849, %v848
      %858 = vst [vmem:[#allocation3 + $0x20] sm:$0xff] %v850
      %859 = vst [vmem:[#allocation3 + $0x28] sm:$0xff] %v851
      %860 = vst [vmem:[#allocation3 + $0x30] sm:$0xff] %v852
      %861 = vst [vmem:[#allocation3 + $0x38] sm:$0xff] %v853
      %862 = vrot.lane.b32.xlu0 %v686, 15
      %v863 = vpop.permute.xlu0 %862
      %864 = vrot.lane.b32.xlu0 %v687, 15
      %v865 = vpop.permute.xlu0 %864
      %866 = vrot.lane.b32.xlu0 %v688, 15
      %v867 = vpop.permute.xlu0 %866
      %868 = vrot.lane.b32.xlu0 %v689, 15
      %v869 = vpop.permute.xlu0 %868
      %870 = vrot.lane.b32.xlu0 %v690, 15
      %v871 = vpop.permute.xlu0 %870
      %872 = vrot.lane.b32.xlu0 %v691, 15
      %v873 = vpop.permute.xlu0 %872
      %874 = vrot.lane.b32.xlu0 %v692, 15
      %v875 = vpop.permute.xlu0 %874
      %876 = vrot.lane.b32.xlu0 %v693, 15
      %v877 = vpop.permute.xlu0 %876
      %v878 = vsel %vm342, %v863, %v865
      %v879 = vsel %vm342, %v867, %v869
      %v880 = vsel %vm342, %v871, %v873
      %v881 = vsel %vm342, %v875, %v877
      %v890 = vsel %vm342, 0.0, %v863
      %v891 = vsel %vm342, 0.0, %v867
      %v892 = vsel %vm342, 0.0, %v871
      %v893 = vsel %vm342, 0.0, %v875
      %v894 = vld [vmem:[%s336] ss:$8 sm:$0x3]
      %v896 = vlaneseq
      %v897 = vshrl.u32 %v896, 7
      %v898 = vsub.s32 0, %v897
      %v899 = vrot.slane %v894, %v898
      %v900 = vlaneseq
      %v901 = vshrl.u32 %v900, 7
      %v902 = vsub.s32 1, %v901
      %v903 = vrot.slane %v894, %v902
      %v906 = vmul.f32 %v890, %v899
      %v907 = vmul.f32 %v878, %v903
      %v908 = vmul.f32 %v891, %v899
      %v909 = vmul.f32 %v879, %v903
      %v910 = vmul.f32 %v892, %v899
      %v911 = vmul.f32 %v880, %v903
      %v912 = vmul.f32 %v893, %v899
      %v913 = vmul.f32 %v881, %v903
      %v914 = vpack.c.bf16 %v908, %v906
      %v915 = vpack.c.bf16 %v909, %v907
      %v916 = vpack.c.bf16 %v912, %v910
      %v917 = vpack.c.bf16 %v913, %v911
      %v922 = vunpack.c.l.b16 %v914
      %v923 = vunpack.c.l.b16 %v915
      %v924 = vunpack.c.h.b16 %v914
      %v925 = vunpack.c.h.b16 %v915
      %v926 = vunpack.c.l.b16 %v916
      %v927 = vunpack.c.l.b16 %v917
      %v928 = vunpack.c.h.b16 %v916
      %v929 = vunpack.c.h.b16 %v917
      %v930 = vpack.c.b16 %v923, %v922
      %v931 = vpack.c.b16 %v925, %v924
      %v932 = vpack.c.b16 %v927, %v926
      %v933 = vpack.c.b16 %v929, %v928
      %938 = vst [vmem:[#allocation3 + $0x40] sm:$0xff] %v930
      %939 = vst [vmem:[#allocation3 + $0x48] sm:$0xff] %v931
      %940 = vst [vmem:[#allocation3 + $0x50] sm:$0xff] %v932
      %941 = vst [vmem:[#allocation3 + $0x58] sm:$0xff] %v933
      %942 = vrot.lane.b32.xlu0 %v686, 1
      %v943 = vpop.permute.xlu0 %942
      %944 = vrot.lane.b32.xlu0 %v687, 1
      %v945 = vpop.permute.xlu0 %944
      %946 = vrot.lane.b32.xlu0 %v688, 1
      %v947 = vpop.permute.xlu0 %946
      %948 = vrot.lane.b32.xlu0 %v689, 1
      %v949 = vpop.permute.xlu0 %948
      %950 = vrot.lane.b32.xlu0 %v690, 1
      %v951 = vpop.permute.xlu0 %950
      %952 = vrot.lane.b32.xlu0 %v691, 1
      %v953 = vpop.permute.xlu0 %952
      %954 = vrot.lane.b32.xlu0 %v692, 1
      %v955 = vpop.permute.xlu0 %954
      %956 = vrot.lane.b32.xlu0 %v693, 1
      %v957 = vpop.permute.xlu0 %956
      %v958 = vsel %vm378, %v943, %v945
      %v959 = vsel %vm378, %v947, %v949
      %v960 = vsel %vm378, %v951, %v953
      %v961 = vsel %vm378, %v955, %v957
      %v970 = vsel %vm378, 0.0, %v943
      %v971 = vsel %vm378, 0.0, %v947
      %v972 = vsel %vm378, 0.0, %v951
      %v973 = vsel %vm378, 0.0, %v955
      %v974 = vld [vmem:[%s372] ss:$8 sm:$0x3]
      %v976 = vlaneseq
      %v977 = vshrl.u32 %v976, 7
      %v978 = vsub.s32 0, %v977
      %v979 = vrot.slane %v974, %v978
      %v980 = vlaneseq
      %v981 = vshrl.u32 %v980, 7
      %v982 = vsub.s32 1, %v981
      %v983 = vrot.slane %v974, %v982
      %v986 = vmul.f32 %v970, %v979
      %v987 = vmul.f32 %v958, %v983
      %v988 = vmul.f32 %v971, %v979
      %v989 = vmul.f32 %v959, %v983
      %v990 = vmul.f32 %v972, %v979
      %v991 = vmul.f32 %v960, %v983
      %v992 = vmul.f32 %v973, %v979
      %v993 = vmul.f32 %v961, %v983
      %v994 = vpack.c.bf16 %v988, %v986
      %v995 = vpack.c.bf16 %v989, %v987
      %v996 = vpack.c.bf16 %v992, %v990
      %v997 = vpack.c.bf16 %v993, %v991
      %v1002 = vunpack.c.l.b16 %v994
      %v1003 = vunpack.c.l.b16 %v995
      %v1004 = vunpack.c.h.b16 %v994
      %v1005 = vunpack.c.h.b16 %v995
      %v1006 = vunpack.c.l.b16 %v996
      %v1007 = vunpack.c.l.b16 %v997
      %v1008 = vunpack.c.h.b16 %v996
      %v1009 = vunpack.c.h.b16 %v997
      %v1010 = vpack.c.b16 %v1003, %v1002
      %v1011 = vpack.c.b16 %v1005, %v1004
      %v1012 = vpack.c.b16 %v1007, %v1006
      %v1013 = vpack.c.b16 %v1009, %v1008
      %1018 = vst [vmem:[#allocation3 + $0x60] sm:$0xff] %v1010
      %1019 = vst [vmem:[#allocation3 + $0x68] sm:$0xff] %v1011
      %1020 = vst [vmem:[#allocation3 + $0x70] sm:$0xff] %v1012
      %1021 = vst [vmem:[#allocation3 + $0x78] sm:$0xff] %v1013
      %v1022 = vpack.c.bf16 %v688, %v686
      %v1023 = vpack.c.bf16 %v689, %v687
      %v1024 = vpack.c.bf16 %v692, %v690
      %v1025 = vpack.c.bf16 %v693, %v691
      %v1030 = vunpack.c.l.b16 %v1022
      %v1031 = vunpack.c.l.b16 %v1023
      %v1032 = vunpack.c.h.b16 %v1022
      %v1033 = vunpack.c.h.b16 %v1023
      %v1034 = vunpack.c.l.b16 %v1024
      %v1035 = vunpack.c.l.b16 %v1025
      %v1036 = vunpack.c.h.b16 %v1024
      %v1037 = vunpack.c.h.b16 %v1025
      %v1038 = vpack.c.b16 %v1031, %v1030
      %v1039 = vpack.c.b16 %v1033, %v1032
      %v1040 = vpack.c.b16 %v1035, %v1034
      %v1041 = vpack.c.b16 %v1037, %v1036
      %1046 = vst [vmem:[#allocation3 + $0x80] sm:$0xff] %v1038
      %1047 = vst [vmem:[#allocation3 + $0x88] sm:$0xff] %v1039
      %1048 = vst [vmem:[#allocation3 + $0x90] sm:$0xff] %v1040
      %1049 = vst [vmem:[#allocation3 + $0x98] sm:$0xff] %v1041
      %1050 = vrot.lane.b32.xlu0 %v686, 127
      %v1051 = vpop.permute.xlu0 %1050
      %1052 = vrot.lane.b32.xlu0 %v687, 127
      %v1053 = vpop.permute.xlu0 %1052
      %1054 = vrot.lane.b32.xlu0 %v688, 127
      %v1055 = vpop.permute.xlu0 %1054
      %1056 = vrot.lane.b32.xlu0 %v689, 127
      %v1057 = vpop.permute.xlu0 %1056
      %1058 = vrot.lane.b32.xlu0 %v690, 127
      %v1059 = vpop.permute.xlu0 %1058
      %1060 = vrot.lane.b32.xlu0 %v691, 127
      %v1061 = vpop.permute.xlu0 %1060
      %1062 = vrot.lane.b32.xlu0 %v692, 127
      %v1063 = vpop.permute.xlu0 %1062
      %1064 = vrot.lane.b32.xlu0 %v693, 127
      %v1065 = vpop.permute.xlu0 %1064
      %v1066 = vsel %vm426, %v1051, %v1053
      %v1067 = vsel %vm426, %v1055, %v1057
      %v1068 = vsel %vm426, %v1059, %v1061
      %v1069 = vsel %vm426, %v1063, %v1065
      %v1078 = vsel %vm426, %v1053, 0.0
      %v1079 = vsel %vm426, %v1057, 0.0
      %v1080 = vsel %vm426, %v1061, 0.0
      %v1081 = vsel %vm426, %v1065, 0.0
      %v1082 = vld [vmem:[%s420] ss:$8 sm:$0x3]
      %v1084 = vlaneseq
      %v1085 = vshrl.u32 %v1084, 7
      %v1086 = vsub.s32 0, %v1085
      %v1087 = vrot.slane %v1082, %v1086
      %v1088 = vlaneseq
      %v1089 = vshrl.u32 %v1088, 7
      %v1090 = vsub.s32 1, %v1089
      %v1091 = vrot.slane %v1082, %v1090
      %v1094 = vmul.f32 %v1066, %v1087
      %v1095 = vmul.f32 %v1078, %v1091
      %v1096 = vmul.f32 %v1067, %v1087
      %v1097 = vmul.f32 %v1079, %v1091
      %v1098 = vmul.f32 %v1068, %v1087
      %v1099 = vmul.f32 %v1080, %v1091
      %v1100 = vmul.f32 %v1069, %v1087
      %v1101 = vmul.f32 %v1081, %v1091
      %v1102 = vpack.c.bf16 %v1096, %v1094
      %v1103 = vpack.c.bf16 %v1097, %v1095
      %v1104 = vpack.c.bf16 %v1100, %v1098
      %v1105 = vpack.c.bf16 %v1101, %v1099
      %v1110 = vunpack.c.l.b16 %v1102
      %v1111 = vunpack.c.l.b16 %v1103
      %v1112 = vunpack.c.h.b16 %v1102
      %v1113 = vunpack.c.h.b16 %v1103
      %v1114 = vunpack.c.l.b16 %v1104
      %v1115 = vunpack.c.l.b16 %v1105
      %v1116 = vunpack.c.h.b16 %v1104
      %v1117 = vunpack.c.h.b16 %v1105
      %v1118 = vpack.c.b16 %v1111, %v1110
      %v1119 = vpack.c.b16 %v1113, %v1112
      %v1120 = vpack.c.b16 %v1115, %v1114
      %v1121 = vpack.c.b16 %v1117, %v1116
      %1126 = vst [vmem:[#allocation3 + $0xa0] sm:$0xff] %v1118
      %1127 = vst [vmem:[#allocation3 + $0xa8] sm:$0xff] %v1119
      %1128 = vst [vmem:[#allocation3 + $0xb0] sm:$0xff] %v1120
      %1129 = vst [vmem:[#allocation3 + $0xb8] sm:$0xff] %v1121
      %1130 = vrot.lane.b32.xlu0 %v686, 113
      %v1131 = vpop.permute.xlu0 %1130
      %1132 = vrot.lane.b32.xlu0 %v687, 113
      %v1133 = vpop.permute.xlu0 %1132
      %1134 = vrot.lane.b32.xlu0 %v688, 113
      %v1135 = vpop.permute.xlu0 %1134
      %1136 = vrot.lane.b32.xlu0 %v689, 113
      %v1137 = vpop.permute.xlu0 %1136
      %1138 = vrot.lane.b32.xlu0 %v690, 113
      %v1139 = vpop.permute.xlu0 %1138
      %1140 = vrot.lane.b32.xlu0 %v691, 113
      %v1141 = vpop.permute.xlu0 %1140
      %1142 = vrot.lane.b32.xlu0 %v692, 113
      %v1143 = vpop.permute.xlu0 %1142
      %1144 = vrot.lane.b32.xlu0 %v693, 113
      %v1145 = vpop.permute.xlu0 %1144
      %v1146 = vsel %vm462, %v1131, %v1133
      %v1147 = vsel %vm462, %v1135, %v1137
      %v1148 = vsel %vm462, %v1139, %v1141
      %v1149 = vsel %vm462, %v1143, %v1145
      %v1158 = vsel %vm462, %v1133, 0.0
      %v1159 = vsel %vm462, %v1137, 0.0
      %v1160 = vsel %vm462, %v1141, 0.0
      %v1161 = vsel %vm462, %v1145, 0.0
      %v1162 = vld [vmem:[%s456] ss:$8 sm:$0x3]
      %v1164 = vlaneseq
      %v1165 = vshrl.u32 %v1164, 7
      %v1166 = vsub.s32 0, %v1165
      %v1167 = vrot.slane %v1162, %v1166
      %v1168 = vlaneseq
      %v1169 = vshrl.u32 %v1168, 7
      %v1170 = vsub.s32 1, %v1169
      %v1171 = vrot.slane %v1162, %v1170
      %v1174 = vmul.f32 %v1146, %v1167
      %v1175 = vmul.f32 %v1158, %v1171
      %v1176 = vmul.f32 %v1147, %v1167
      %v1177 = vmul.f32 %v1159, %v1171
      %v1178 = vmul.f32 %v1148, %v1167
      %v1179 = vmul.f32 %v1160, %v1171
      %v1180 = vmul.f32 %v1149, %v1167
      %v1181 = vmul.f32 %v1161, %v1171
      %v1182 = vpack.c.bf16 %v1176, %v1174
      %v1183 = vpack.c.bf16 %v1177, %v1175
      %v1184 = vpack.c.bf16 %v1180, %v1178
      %v1185 = vpack.c.bf16 %v1181, %v1179
      %v1190 = vunpack.c.l.b16 %v1182
      %v1191 = vunpack.c.l.b16 %v1183
      %v1192 = vunpack.c.h.b16 %v1182
      %v1193 = vunpack.c.h.b16 %v1183
      %v1194 = vunpack.c.l.b16 %v1184
      %v1195 = vunpack.c.l.b16 %v1185
      %v1196 = vunpack.c.h.b16 %v1184
      %v1197 = vunpack.c.h.b16 %v1185
      %v1198 = vpack.c.b16 %v1191, %v1190
      %v1199 = vpack.c.b16 %v1193, %v1192
      %v1200 = vpack.c.b16 %v1195, %v1194
      %v1201 = vpack.c.b16 %v1197, %v1196
      %1206 = vst [vmem:[#allocation3 + $0xc0] sm:$0xff] %v1198
      %1207 = vst [vmem:[#allocation3 + $0xc8] sm:$0xff] %v1199
      %1208 = vst [vmem:[#allocation3 + $0xd0] sm:$0xff] %v1200
      %1209 = vst [vmem:[#allocation3 + $0xd8] sm:$0xff] %v1201
      %1210 = vrot.lane.b32.xlu0 %v686, 112
      %v1211 = vpop.permute.xlu0 %1210
      %1212 = vrot.lane.b32.xlu0 %v687, 112
      %v1213 = vpop.permute.xlu0 %1212
      %1214 = vrot.lane.b32.xlu0 %v688, 112
      %v1215 = vpop.permute.xlu0 %1214
      %1216 = vrot.lane.b32.xlu0 %v689, 112
      %v1217 = vpop.permute.xlu0 %1216
      %1218 = vrot.lane.b32.xlu0 %v690, 112
      %v1219 = vpop.permute.xlu0 %1218
      %1220 = vrot.lane.b32.xlu0 %v691, 112
      %v1221 = vpop.permute.xlu0 %1220
      %1222 = vrot.lane.b32.xlu0 %v692, 112
      %v1223 = vpop.permute.xlu0 %1222
      %1224 = vrot.lane.b32.xlu0 %v693, 112
      %v1225 = vpop.permute.xlu0 %1224
      %v1226 = vsel %vm500, %v1211, %v1213
      %v1227 = vsel %vm500, %v1215, %v1217
      %v1228 = vsel %vm500, %v1219, %v1221
      %v1229 = vsel %vm500, %v1223, %v1225
      %v1238 = vsel %vm500, %v1213, 0.0
      %v1239 = vsel %vm500, %v1217, 0.0
      %v1240 = vsel %vm500, %v1221, 0.0
      %v1241 = vsel %vm500, %v1225, 0.0
      %v1242 = vld [vmem:[%s494] ss:$8 sm:$0x3]
      %v1244 = vlaneseq
      %v1245 = vshrl.u32 %v1244, 7
      %v1246 = vsub.s32 0, %v1245
      %v1247 = vrot.slane %v1242, %v1246
      %v1248 = vlaneseq
      %v1249 = vshrl.u32 %v1248, 7
      %v1250 = vsub.s32 1, %v1249
      %v1251 = vrot.slane %v1242, %v1250
      %v1254 = vmul.f32 %v1226, %v1247
      %v1255 = vmul.f32 %v1238, %v1251
      %v1256 = vmul.f32 %v1227, %v1247
      %v1257 = vmul.f32 %v1239, %v1251
      %v1258 = vmul.f32 %v1228, %v1247
      %v1259 = vmul.f32 %v1240, %v1251
      %v1260 = vmul.f32 %v1229, %v1247
      %v1261 = vmul.f32 %v1241, %v1251
      %v1262 = vpack.c.bf16 %v1256, %v1254
      %v1263 = vpack.c.bf16 %v1257, %v1255
      %v1264 = vpack.c.bf16 %v1260, %v1258
      %v1265 = vpack.c.bf16 %v1261, %v1259
      %v1270 = vunpack.c.l.b16 %v1262
      %v1271 = vunpack.c.l.b16 %v1263
      %v1272 = vunpack.c.h.b16 %v1262
      %v1273 = vunpack.c.h.b16 %v1263
      %v1274 = vunpack.c.l.b16 %v1264
      %v1275 = vunpack.c.l.b16 %v1265
      %v1276 = vunpack.c.h.b16 %v1264
      %v1277 = vunpack.c.h.b16 %v1265
      %v1278 = vpack.c.b16 %v1271, %v1270
      %v1279 = vpack.c.b16 %v1273, %v1272
      %v1280 = vpack.c.b16 %v1275, %v1274
      %v1281 = vpack.c.b16 %v1277, %v1276
      %1286 = vst [vmem:[#allocation3 + $0xe0] sm:$0xff] %v1278
      %1287 = vst [vmem:[#allocation3 + $0xe8] sm:$0xff] %v1279
      %1288 = vst [vmem:[#allocation3 + $0xf0] sm:$0xff] %v1280
      %1289 = vst [vmem:[#allocation3 + $0xf8] sm:$0xff] %v1281
      %1290 = vrot.lane.b32.xlu0 %v686, 111
      %v1291 = vpop.permute.xlu0 %1290
      %1292 = vrot.lane.b32.xlu0 %v687, 111
      %v1293 = vpop.permute.xlu0 %1292
      %1294 = vrot.lane.b32.xlu0 %v688, 111
      %v1295 = vpop.permute.xlu0 %1294
      %1296 = vrot.lane.b32.xlu0 %v689, 111
      %v1297 = vpop.permute.xlu0 %1296
      %1298 = vrot.lane.b32.xlu0 %v690, 111
      %v1299 = vpop.permute.xlu0 %1298
      %1300 = vrot.lane.b32.xlu0 %v691, 111
      %v1301 = vpop.permute.xlu0 %1300
      %1302 = vrot.lane.b32.xlu0 %v692, 111
      %v1303 = vpop.permute.xlu0 %1302
      %1304 = vrot.lane.b32.xlu0 %v693, 111
      %v1305 = vpop.permute.xlu0 %1304
      %v1306 = vsel %vm536, %v1291, %v1293
      %v1307 = vsel %vm536, %v1295, %v1297
      %v1308 = vsel %vm536, %v1299, %v1301
      %v1309 = vsel %vm536, %v1303, %v1305
      %v1318 = vsel %vm536, %v1293, 0.0
      %v1319 = vsel %vm536, %v1297, 0.0
      %v1320 = vsel %vm536, %v1301, 0.0
      %v1321 = vsel %vm536, %v1305, 0.0
      %v1322 = vld [vmem:[%s530] ss:$8 sm:$0x3]
      %v1324 = vlaneseq
      %v1325 = vshrl.u32 %v1324, 7
      %v1326 = vsub.s32 0, %v1325
      %v1327 = vrot.slane %v1322, %v1326
      %v1328 = vlaneseq
      %v1329 = vshrl.u32 %v1328, 7
      %v1330 = vsub.s32 1, %v1329
      %v1331 = vrot.slane %v1322, %v1330
      %v1334 = vmul.f32 %v1306, %v1327
      %v1335 = vmul.f32 %v1318, %v1331
      %v1336 = vmul.f32 %v1307, %v1327
      %v1337 = vmul.f32 %v1319, %v1331
      %v1338 = vmul.f32 %v1308, %v1327
      %v1339 = vmul.f32 %v1320, %v1331
      %v1340 = vmul.f32 %v1309, %v1327
      %v1341 = vmul.f32 %v1321, %v1331
      %v1342 = vpack.c.bf16 %v1336, %v1334
      %v1343 = vpack.c.bf16 %v1337, %v1335
      %v1344 = vpack.c.bf16 %v1340, %v1338
      %v1345 = vpack.c.bf16 %v1341, %v1339
      %v1350 = vunpack.c.l.b16 %v1342
      %v1351 = vunpack.c.l.b16 %v1343
      %v1352 = vunpack.c.h.b16 %v1342
      %v1353 = vunpack.c.h.b16 %v1343
      %v1354 = vunpack.c.l.b16 %v1344
      %v1355 = vunpack.c.l.b16 %v1345
      %v1356 = vunpack.c.h.b16 %v1344
      %v1357 = vunpack.c.h.b16 %v1345
      %v1358 = vpack.c.b16 %v1351, %v1350
      %v1359 = vpack.c.b16 %v1353, %v1352
      %v1360 = vpack.c.b16 %v1355, %v1354
      %v1361 = vpack.c.b16 %v1357, %v1356
      %1366 = vst [vmem:[#allocation3 + $0x100] sm:$0xff] %v1358
      %1367 = vst [vmem:[#allocation3 + $0x108] sm:$0xff] %v1359
      %1368 = vst [vmem:[#allocation3 + $0x110] sm:$0xff] %v1360
      %1369 = vst [vmem:[#allocation3 + $0x118] sm:$0xff] %v1361
      %v1370 = vld [vmem:[%s5] sm:$0x3f]
      %v1371 = vld [vmem:[#allocation3] sm:$0xff]
      %v1372 = vld [vmem:[#allocation3 + $0x8] sm:$0xff]
      %v1373 = vld [vmem:[#allocation3 + $0x10] sm:$0xff]
      %v1374 = vld [vmem:[#allocation3 + $0x18] sm:$0xff]
      %v1375 = vld [vmem:[#allocation3 + $0x20] sm:$0xff]
      %v1376 = vld [vmem:[#allocation3 + $0x28] sm:$0xff]
      %v1377 = vld [vmem:[#allocation3 + $0x30] sm:$0xff]
      %v1378 = vld [vmem:[#allocation3 + $0x38] sm:$0xff]
      %v1379 = vld [vmem:[#allocation3 + $0x40] sm:$0xff]
      %v1380 = vld [vmem:[#allocation3 + $0x48] sm:$0xff]
      %v1381 = vld [vmem:[#allocation3 + $0x50] sm:$0xff]
      %v1382 = vld [vmem:[#allocation3 + $0x58] sm:$0xff]
      %v1383 = vld [vmem:[#allocation3 + $0x60] sm:$0xff]
      %v1384 = vld [vmem:[#allocation3 + $0x68] sm:$0xff]
      %v1385 = vld [vmem:[#allocation3 + $0x70] sm:$0xff]
      %v1386 = vld [vmem:[#allocation3 + $0x78] sm:$0xff]
      %v1387 = vld [vmem:[#allocation3 + $0x80] sm:$0xff]
      %v1388 = vld [vmem:[#allocation3 + $0x88] sm:$0xff]
      %v1389 = vld [vmem:[#allocation3 + $0x90] sm:$0xff]
      %v1390 = vld [vmem:[#allocation3 + $0x98] sm:$0xff]
      %v1391 = vld [vmem:[#allocation3 + $0xa0] sm:$0xff]
      %v1392 = vld [vmem:[#allocation3 + $0xa8] sm:$0xff]
      %v1393 = vld [vmem:[#allocation3 + $0xb0] sm:$0xff]
      %v1394 = vld [vmem:[#allocation3 + $0xb8] sm:$0xff]
      %v1395 = vld [vmem:[#allocation3 + $0xc0] sm:$0xff]
      %v1396 = vld [vmem:[#allocation3 + $0xc8] sm:$0xff]
      %v1397 = vld [vmem:[#allocation3 + $0xd0] sm:$0xff]
      %v1398 = vld [vmem:[#allocation3 + $0xd8] sm:$0xff]
      %v1399 = vld [vmem:[#allocation3 + $0xe0] sm:$0xff]
      %v1400 = vld [vmem:[#allocation3 + $0xe8] sm:$0xff]
      %v1401 = vld [vmem:[#allocation3 + $0xf0] sm:$0xff]
      %v1402 = vld [vmem:[#allocation3 + $0xf8] sm:$0xff]
      %v1403 = vld [vmem:[#allocation3 + $0x100] sm:$0xff]
      %v1404 = vld [vmem:[#allocation3 + $0x108] sm:$0xff]
      %v1405 = vld [vmem:[#allocation3 + $0x110] sm:$0xff]
      %v1406 = vld [vmem:[#allocation3 + $0x118] sm:$0xff]
      %v1407 = vld [vmem:[%s6] sm:$0xf]
      %1409 = vset.pattern.permute.xlu0 0
      %1410 = vperm.xlu0 %1409, %v1407
      %v1411 = vpop.permute.xlu0 %1410
      %v1414 = vcombine.high %v1370, %v1370
      %v1416 = vunpack.c.l.s4 1983009808
      %v1417 = vunpack.c.0.s8 %v1416
      %v1418 = vlaneseq
      %v1419 = vshrl.u32 %v1418, 7
      %v1420 = vsub.s32 %v1417, %v1419
      %v1421 = vrot.slane %v1370, %v1420
      %v1423 = vunpack.c.l.s4 1983009808
      %v1424 = vunpack.c.0.s8 %v1423
      %v1425 = vlaneseq
      %v1426 = vshrl.u32 %v1425, 7
      %v1427 = vsub.s32 %v1424, %v1426
      %v1428 = vrot.slane %v1414, %v1427
      %v1429 = vcombine.high %v1421, %v1421
      %v1468 = vunpack.c.l.b16 %v1371
      %v1469 = vunpack.c.h.b16 %v1371
      %v1470 = vunpack.c.l.b16 %v1372
      %v1471 = vunpack.c.h.b16 %v1372
      %v1472 = vunpack.c.l.b16 %v1373
      %v1473 = vunpack.c.h.b16 %v1373
      %v1474 = vunpack.c.l.b16 %v1374
      %v1475 = vunpack.c.h.b16 %v1374
      %v1476 = vunpack.c.l.b16 %v1375
      %v1477 = vunpack.c.h.b16 %v1375
      %v1478 = vunpack.c.l.b16 %v1376
      %v1479 = vunpack.c.h.b16 %v1376
      %v1480 = vunpack.c.l.b16 %v1377
      %v1481 = vunpack.c.h.b16 %v1377
      %v1482 = vunpack.c.l.b16 %v1378
      %v1483 = vunpack.c.h.b16 %v1378
      %v1484 = vunpack.c.l.b16 %v1379
      %v1485 = vunpack.c.h.b16 %v1379
      %v1486 = vunpack.c.l.b16 %v1380
      %v1487 = vunpack.c.h.b16 %v1380
      %v1488 = vunpack.c.l.b16 %v1381
      %v1489 = vunpack.c.h.b16 %v1381
      %v1490 = vunpack.c.l.b16 %v1382
      %v1491 = vunpack.c.h.b16 %v1382
      %v1492 = vunpack.c.l.b16 %v1383
      %v1493 = vunpack.c.h.b16 %v1383
      %v1494 = vunpack.c.l.b16 %v1384
      %v1495 = vunpack.c.h.b16 %v1384
      %v1496 = vunpack.c.l.b16 %v1385
      %v1497 = vunpack.c.h.b16 %v1385
      %v1498 = vunpack.c.l.b16 %v1386
      %v1499 = vunpack.c.h.b16 %v1386
      %v1500 = vunpack.c.l.b16 %v1387
      %v1501 = vunpack.c.h.b16 %v1387
      %v1502 = vunpack.c.l.b16 %v1388
      %v1503 = vunpack.c.h.b16 %v1388
      %v1504 = vunpack.c.l.b16 %v1389
      %v1505 = vunpack.c.h.b16 %v1389
      %v1506 = vunpack.c.l.b16 %v1390
      %v1507 = vunpack.c.h.b16 %v1390
      %v1508 = vunpack.c.l.b16 %v1391
      %v1509 = vunpack.c.h.b16 %v1391
      %v1510 = vunpack.c.l.b16 %v1392
      %v1511 = vunpack.c.h.b16 %v1392
      %v1512 = vunpack.c.l.b16 %v1393
      %v1513 = vunpack.c.h.b16 %v1393
      %v1514 = vunpack.c.l.b16 %v1394
      %v1515 = vunpack.c.h.b16 %v1394
      %v1516 = vunpack.c.l.b16 %v1395
      %v1517 = vunpack.c.h.b16 %v1395
      %v1518 = vunpack.c.l.b16 %v1396
      %v1519 = vunpack.c.h.b16 %v1396
      %v1520 = vunpack.c.l.b16 %v1397
      %v1521 = vunpack.c.h.b16 %v1397
      %v1522 = vunpack.c.l.b16 %v1398
      %v1523 = vunpack.c.h.b16 %v1398
      %v1524 = vunpack.c.l.b16 %v1399
      %v1525 = vunpack.c.h.b16 %v1399
      %v1526 = vunpack.c.l.b16 %v1400
      %v1527 = vunpack.c.h.b16 %v1400
      %v1528 = vunpack.c.l.b16 %v1401
      %v1529 = vunpack.c.h.b16 %v1401
      %v1530 = vunpack.c.l.b16 %v1402
      %v1531 = vunpack.c.h.b16 %v1402
      %v1532 = vunpack.c.l.b16 %v1403
      %v1533 = vunpack.c.h.b16 %v1403
      %v1534 = vunpack.c.l.b16 %v1404
      %v1535 = vunpack.c.h.b16 %v1404
      %v1536 = vunpack.c.l.b16 %v1405
      %v1537 = vunpack.c.h.b16 %v1405
      %v1538 = vunpack.c.l.b16 %v1406
      %v1539 = vunpack.c.h.b16 %v1406
      %v1540 = vpack.c.b16 %v1470, %v1468
      %v1541 = vpack.c.b16 %v1471, %v1469
      %v1542 = vpack.c.b16 %v1474, %v1472
      %v1543 = vpack.c.b16 %v1475, %v1473
      %v1544 = vpack.c.b16 %v1478, %v1476
      %v1545 = vpack.c.b16 %v1479, %v1477
      %v1546 = vpack.c.b16 %v1482, %v1480
      %v1547 = vpack.c.b16 %v1483, %v1481
      %v1548 = vpack.c.b16 %v1486, %v1484
      %v1549 = vpack.c.b16 %v1487, %v1485
      %v1550 = vpack.c.b16 %v1490, %v1488
      %v1551 = vpack.c.b16 %v1491, %v1489
      %v1552 = vpack.c.b16 %v1494, %v1492
      %v1553 = vpack.c.b16 %v1495, %v1493
      %v1554 = vpack.c.b16 %v1498, %v1496
      %v1555 = vpack.c.b16 %v1499, %v1497
      %v1556 = vpack.c.b16 %v1502, %v1500
      %v1557 = vpack.c.b16 %v1503, %v1501
      %v1558 = vpack.c.b16 %v1506, %v1504
      %v1559 = vpack.c.b16 %v1507, %v1505
      %v1560 = vpack.c.b16 %v1510, %v1508
      %v1561 = vpack.c.b16 %v1511, %v1509
      %v1562 = vpack.c.b16 %v1514, %v1512
      %v1563 = vpack.c.b16 %v1515, %v1513
      %v1564 = vpack.c.b16 %v1518, %v1516
      %v1565 = vpack.c.b16 %v1519, %v1517
      %v1566 = vpack.c.b16 %v1522, %v1520
      %v1567 = vpack.c.b16 %v1523, %v1521
      %v1568 = vpack.c.b16 %v1526, %v1524
      %v1569 = vpack.c.b16 %v1527, %v1525
      %v1570 = vpack.c.b16 %v1530, %v1528
      %v1571 = vpack.c.b16 %v1531, %v1529
      %v1572 = vpack.c.b16 %v1534, %v1532
      %v1573 = vpack.c.b16 %v1535, %v1533
      %v1574 = vpack.c.b16 %v1538, %v1536
      %v1575 = vpack.c.b16 %v1539, %v1537
      %vm1612 = vcmask 261120
      %v1614 = vsel %vm1612, %v1428, 0
      %1616 = vmatprep.subr.bf16.mxu0 %v1555
      %1617 = vmatpush1.bf16.msra.mxu0 %v1554
      %1618 = vmatprep.subr.bf16.mxu0 %v1553
      %1619 = vmatpush1.bf16.msra.mxu0 %v1552
      %1620 = vmatprep.subr.bf16.mxu0 %v1551
      %1621 = vmatpush1.bf16.msra.mxu0 %v1550
      %1622 = vmatprep.subr.bf16.mxu0 %v1549
      %1623 = vmatpush1.bf16.msra.mxu0 %v1548
      %1624 = vmatprep.subr.bf16.mxu0 %v1547
      %1625 = vmatpush1.bf16.msra.mxu0 %v1546
      %1626 = vmatprep.subr.bf16.mxu0 %v1545
      %1627 = vmatpush1.bf16.msra.mxu0 %v1544
      %1628 = vmatprep.subr.bf16.mxu0 %v1543
      %1629 = vmatpush1.bf16.msra.mxu0 %v1542
      %1630 = vmatprep.subr.bf16.mxu0 %v1541
      %1631 = vmatpush1.bf16.msra.mxu0 %v1540
      %1632 = vmatprep.subr.bf16.mxu0 %v1571
      %1633 = vmatpush2.bf16.msra.mxu0 %v1570
      %1634 = vmatprep.subr.bf16.mxu0 %v1569
      %1635 = vmatpush2.bf16.msra.mxu0 %v1568
      %1636 = vmatprep.subr.bf16.mxu0 %v1567
      %1637 = vmatpush2.bf16.msra.mxu0 %v1566
      %1638 = vmatprep.subr.bf16.mxu0 %v1565
      %1639 = vmatpush2.bf16.msra.mxu0 %v1564
      %1640 = vmatprep.subr.bf16.mxu0 %v1563
      %1641 = vmatpush2.bf16.msra.mxu0 %v1562
      %1642 = vmatprep.subr.bf16.mxu0 %v1561
      %1643 = vmatpush2.bf16.msra.mxu0 %v1560
      %1644 = vmatprep.subr.bf16.mxu0 %v1559
      %1645 = vmatpush2.bf16.msra.mxu0 %v1558
      %1646 = vmatprep.subr.bf16.mxu0 %v1557
      %1647 = vmatpush2.bf16.msra.mxu0 %v1556
      %1648 = vmatprep.mubr.bf16.mxu0 %v1429
      %1649 = vmatmul.mubr.bf16.gmra.mxu0 %v1421
      %v1650 = vpop.f32.mrf.mxu0
      %v1651 = vadd.f32 %v1411, %v1650
      %v1652 = vpop.f32.mrf.mxu0
      %v1653 = vadd.f32 %v1411, %v1652
      %v1654 = vpop.f32.mrf.mxu0
      %v1655 = vpop.f32.mrf.mxu0
      %1656 = vdwg.mxu0
      %1657 = vmatprep.subr.bf16.mxu0 0
      %1658 = vmatpush1.bf16.msra.mxu0 0
      %1659 = vmatprep.subr.bf16.mxu0 0
      %1660 = vmatpush1.bf16.msra.mxu0 0
      %1661 = vmatprep.subr.bf16.mxu0 0
      %1662 = vmatpush1.bf16.msra.mxu0 0
      %1663 = vmatprep.subr.bf16.mxu0 0
      %1664 = vmatpush1.bf16.msra.mxu0 0
      %1665 = vmatprep.subr.bf16.mxu0 0
      %1666 = vmatpush1.bf16.msra.mxu0 0
      %1667 = vmatprep.subr.bf16.mxu0 0
      %1668 = vmatpush1.bf16.msra.mxu0 0
      %1669 = vmatprep.subr.bf16.mxu0 %v1575
      %1670 = vmatpush1.bf16.msra.mxu0 %v1574
      %1671 = vmatprep.subr.bf16.mxu0 %v1573
      %1672 = vmatpush1.bf16.msra.mxu0 %v1572
      %1673 = vmatprep.subr.bf16.mxu0 0
      %1674 = vmatpush2.bf16.msra.mxu0 0
      %1675 = vmatprep.subr.bf16.mxu0 0
      %1676 = vmatpush2.bf16.msra.mxu0 0
      %1677 = vmatprep.subr.bf16.mxu0 0
      %1678 = vmatpush2.bf16.msra.mxu0 0
      %1679 = vmatprep.subr.bf16.mxu0 0
      %1680 = vmatpush2.bf16.msra.mxu0 0
      %1681 = vmatprep.subr.bf16.mxu0 0
      %1682 = vmatpush2.bf16.msra.mxu0 0
      %1683 = vmatprep.subr.bf16.mxu0 0
      %1684 = vmatpush2.bf16.msra.mxu0 0
      %1685 = vmatprep.subr.bf16.mxu0 0
      %1686 = vmatpush2.bf16.msra.mxu0 0
      %1687 = vmatprep.subr.bf16.mxu0 0
      %1688 = vmatpush2.bf16.msra.mxu0 0
      %1689 = vmatprep.mubr.bf16.mxu0 0
      %1690 = vmatmul.mubr.bf16.gmra.mxu0 %v1614
      %v1691 = vpop.f32.mrf.mxu0
      %v1692 = vadd.f32 %v1651, %v1691
      %v1693 = vpop.f32.mrf.mxu0
      %v1694 = vadd.f32 %v1653, %v1693
      %v1695 = vpop.f32.mrf.mxu0
      %v1696 = vpop.f32.mrf.mxu0
      %1697 = vdwg.mxu0
      %v1700 = vcombine.low %v1692, %v1694
      %v1702 = vsub.f32 %v261, %v1700
      %1703 = vst [vmem:[%s258] sm:$0xff] %v1702
      %p1704 = scmp.lt.s32.totalorder %s24, 1
      %s1705 = scalar_select %p1704, %s24, 1
      %s1706 = smul.addr %s1705, 2
      %s1707 = smul.addr %s1706, 4
      %s1708 = scalar_lea.vmem %s7, %s1707
      // Predicated region
      $region45: #{_lambda_.1} parent=43 // pred_check
        %p1709 = pneg %p173
      $region46: #{_lambda_.1} parent=43 // pred_check_branch
        %1711 = sbr.rel (%p1709) target = $region48
      $region47: #{_lambda_.1} parent=43 // pred_region
        _
      $region48: #{_lambda_.1} parent=43 // pred_fallthru
        _
    $region44: #{_lambda_.1} parent=5 // pred_fallthru
      _
    %p1712 = scmp.le.s32.totalorder 2, %s19
    // Predicated region
    $region49: #{_lambda_.1} parent=5 // pred_check
      %p1713 = pneg %p1712
    $region50: #{_lambda_.1} parent=5 // pred_check_branch
      %1715 = sbr.rel (%p1713) target = $region52
    $region51: #{_lambda_.1} parent=5 // pred_region
      %s1716 = ssub.s32 %s19, 2
      // Predicated region
      $region53: #{_lambda_.1} parent=51 // pred_check
        %p1717 = pneg %p179
      $region54: #{_lambda_.1} parent=51 // pred_check_branch
        %1719 = sbr.rel (%p1717) target = $region56
      $region55: #{_lambda_.1} parent=51 // pred_region
        %p1720 = scmp.lt.s32.totalorder %s25, 1
        %s1721 = scalar_select %p1720, %s25, 1
        %s1722 = smul.addr %s1721, 2
        %s1723 = smul.addr %s1722, 4
        %s1724 = scalar_lea.vmem %s7, %s1723
      $region56: #{_lambda_.1} parent=51 // pred_fallthru
        _
    $region52: #{_lambda_.1} parent=5 // pred_fallthru
      _
  $region6: #{_lambda_.1} parent=0 // loop_footer
    %s23 = sadd.s32 1, %s19
  $region7: #{_lambda_.1} parent=0 // loop_footer_branch
    %18 = sbr.rel target = $region3
  $region8: #{_lambda_.1} parent=0 // loop_exit
    _

</llo_original>
